<compile_context>
chip_gen: v7x
topology: tpu7x:2x2x1
jax: 0.10.0
libtpu: 0.0.40
codegen_flags: <defaults>
</compile_context>

<pallas_src>
import functools

import jax
import jax.numpy as jnp
from jax import lax
from jax.experimental import pallas as pl
from jax.experimental.pallas import tpu as pltpu


def _gru_recurrent_kernel(gi_ref, h0_ref, whh_ref, bhh_ref, out_ref, h_scratch,
                          *, time_block):
    """Serial GRU recurrence over one block of `time_block` timesteps.

    gi_ref : (Tt, 3, B, H) f32  precomputed x @ W_ih^T + b_ih, gate-major [r, z, n]
    h0_ref : (1, B, H)          initial hidden state (used at grid step 0 only)
    whh_ref: (3, H, H)          per-gate recurrent weights, pre-transposed (h @ W_g)
    bhh_ref: (3, 1, H) f32      per-gate recurrent biases
    out_ref: (Tt, B, H)         per-timestep hidden states
    h_scratch: (B, H) f32       hidden state carried across grid steps
    """
    @pl.when(pl.program_id(0) == 0)
    def _():
        h_scratch[...] = h0_ref[0].astype(jnp.float32)

    # Resident per-gate recurrent weights & biases (constant across all grid steps).
    w_r, w_z, w_n = whh_ref[0], whh_ref[1], whh_ref[2]          # (H, H), native dtype
    b_r, b_z, b_n = bhh_ref[0], bhh_ref[1], bhh_ref[2]          # (1, H), f32

    def step(tt, h):
        gi_t = gi_ref[tt]                                       # (3, B, H), f32
        hm = h.astype(w_r.dtype)                                # bf16 MXU path if weights bf16
        gh_r = jnp.dot(hm, w_r, preferred_element_type=jnp.float32) + b_r
        gh_z = jnp.dot(hm, w_z, preferred_element_type=jnp.float32) + b_z
        gh_n = jnp.dot(hm, w_n, preferred_element_type=jnp.float32) + b_n
        # PyTorch GRU gate math (f32 elementwise):
        r = jax.nn.sigmoid(gi_t[0] + gh_r)
        z = jax.nn.sigmoid(gi_t[1] + gh_z)
        n = jnp.tanh(gi_t[2] + r * gh_n)
        h_new = (1.0 - z) * n + z * h
        out_ref[tt] = h_new.astype(out_ref.dtype)
        return h_new

    h_final = lax.fori_loop(0, time_block, step, h_scratch[...], unroll=True)
    h_scratch[...] = h_final


def encoder_rnn_forward(x, h0, w_ih, w_hh, b_ih, b_hh, *, time_block=32):
    """GRU forward matching torch.nn.GRU(input_size, hidden_size) + EncoderRNN.forward.

    x:    (T, B, I) or (T, I)  (2-D is unsqueezed to batch=1, like the module)
    h0:   (1, B, H)
    w_ih: (3H, I)  PyTorch weight_ih_l0 (gate order [r, z, n])
    w_hh: (3H, H)  PyTorch weight_hh_l0
    b_ih, b_hh: (3H,)
    Returns (output (T, B, H), hidden (1, B, H)).
    """
    if x.ndim == 2:
        x = x[:, None, :]                                       # unsqueeze(1): (T, 1, I)

    T, B, I = x.shape
    H = w_hh.shape[1]
    out_dtype = x.dtype

    # ---- Hoisted input projection: one big matmul, no time dependence. ----
    wih_t = jnp.swapaxes(w_ih, 0, 1)                            # (I, 3H), native dtype
    gi = jnp.dot(x.reshape(T * B, I), wih_t,
                 preferred_element_type=jnp.float32)            # (T*B, 3H) f32
    gi = gi + b_ih.astype(jnp.float32)[None, :]
    # Gate-major layout so the kernel picks gates by leading-axis index
    # (no sub-128-lane slicing of the 3H axis inside the serial loop).
    gi = gi.reshape(T, B, 3, H).transpose(0, 2, 1, 3)           # (T, 3, B, H)

    # Per-gate recurrent weights, pre-transposed so the kernel does h @ (H, H).
    whh_g = jnp.transpose(w_hh.reshape(3, H, H), (0, 2, 1))     # (3, H, H), native dtype
    bhh_g = b_hh.astype(jnp.float32).reshape(3, 1, H)           # (3, 1, H)

    # ---- Time blocking: Tt timesteps per grid step (pad T up if needed). ----
    Tt = max(1, min(time_block, T))
    num_blocks = pl.cdiv(T, Tt)
    Tp = num_blocks * Tt
    if Tp != T:
        gi = jnp.pad(gi, ((0, Tp - T), (0, 0), (0, 0), (0, 0)))

    kernel = functools.partial(_gru_recurrent_kernel, time_block=Tt)

    o_item = jnp.dtype(out_dtype).itemsize
    w_item = jnp.dtype(whh_g.dtype).itemsize
    h_item = jnp.dtype(h0.dtype).itemsize

    cost = pl.CostEstimate(
        flops=2 * Tp * B * 3 * H * H,                           # recurrent matmuls
        transcendentals=3 * Tp * B * H,                         # 2x sigmoid + 1x tanh
        bytes_accessed=(gi.size * 4 + Tp * B * H * o_item
                        + whh_g.size * w_item + bhh_g.size * 4 + h0.size * h_item),
    )

    # VMEM budget: double-buffered gi/out blocks + resident weights/biases/h0 + scratch.
    vmem_bytes = (2 * Tt * 3 * B * H * 4
                  + 2 * Tt * B * H * o_item
                  + 2 * (3 * H * H * w_item + 3 * H * 4 + B * H * h_item)
                  + B * H * 4)
    vmem_limit = int(min(64 * 1024 * 1024, max(4 * 1024 * 1024, 2 * vmem_bytes)))

    out_padded = pl.pallas_call(
        kernel,
        out_shape=jax.ShapeDtypeStruct((Tp, B, H), out_dtype),
        grid_spec=pltpu.PrefetchScalarGridSpec(
            num_scalar_prefetch=0,
            grid=(num_blocks,),
            in_specs=[
                pl.BlockSpec((Tt, 3, B, H), lambda i: (i, 0, 0, 0)),   # gi block
                pl.BlockSpec((1, B, H), lambda i: (0, 0, 0)),          # h0 (resident)
                pl.BlockSpec((3, H, H), lambda i: (0, 0, 0)),          # W_hh per gate
                pl.BlockSpec((3, 1, H), lambda i: (0, 0, 0)),          # b_hh per gate
            ],
            out_specs=pl.BlockSpec((Tt, B, H), lambda i: (i, 0, 0)),
            scratch_shapes=[pltpu.VMEM((B, H), jnp.float32)],          # carried hidden
        ),
        compiler_params=pltpu.CompilerParams(
            dimension_semantics=("arbitrary",),                        # serial recurrence
            vmem_limit_bytes=vmem_limit,
        ),
        cost_estimate=cost,
    )(gi, h0, whh_g, bhh_g)

    output = out_padded[:T]
    hidden = output[T - 1:T]                                    # (1, B, H) == final h
    return output, hidden


def _gru_reference(x, h0, w_ih, w_hh, b_ih, b_hh):
    """Pure-JAX reference (scan) implementing PyTorch GRU semantics."""
    if x.ndim == 2:
        x = x[:, None, :]
    H = w_hh.shape[1]

    def step(h, x_t):
        gi = x_t @ w_ih.T + b_ih
        gh = h @ w_hh.T + b_hh
        i_r, i_z, i_n = gi[:, :H], gi[:, H:2 * H], gi[:, 2 * H:]
        h_r, h_z, h_n = gh[:, :H], gh[:, H:2 * H], gh[:, 2 * H:]
        r = jax.nn.sigmoid(i_r + h_r)
        z = jax.nn.sigmoid(i_z + h_z)
        n = jnp.tanh(i_n + r * h_n)
        h_new = (1.0 - z) * n + z * h
        return h_new, h_new

    h_last, outs = lax.scan(step, h0[0], x)
    return outs, h_last[None]


if __name__ == "__main__":
    # Small shapes consistent with EncoderRNN(input_size, hidden_size):
    T, B, I, H = 8, 2, 16, 32

    key = jax.random.PRNGKey(0)
    kx, k1, k2, k3, k4 = jax.random.split(key, 5)

    # PyTorch-style uniform(-1/sqrt(H), 1/sqrt(H)) init, deterministic.
    bound = 1.0 / jnp.sqrt(jnp.float32(H))
    w_ih = jax.random.uniform(k1, (3 * H, I), jnp.float32, -bound, bound)
    w_hh = jax.random.uniform(k2, (3 * H, H), jnp.float32, -bound, bound)
    b_ih = jax.random.uniform(k3, (3 * H,), jnp.float32, -bound, bound)
    b_hh = jax.random.uniform(k4, (3 * H,), jnp.float32, -bound, bound)

    x = jax.random.normal(kx, (T, B, I), jnp.float32)
    h0 = jnp.zeros((1, B, H), jnp.float32)                      # EncoderRNN.init_hidden

    out, hidden = encoder_rnn_forward(x, h0, w_ih, w_hh, b_ih, b_hh)
    out = jax.block_until_ready(out)
    hidden = jax.block_until_ready(hidden)

    out_ref, hidden_ref = _gru_reference(x, h0, w_ih, w_hh, b_ih, b_hh)
    assert out.shape == (T, B, H) and hidden.shape == (1, B, H)
    assert jnp.allclose(out, out_ref, atol=2e-5, rtol=2e-5)
    assert jnp.allclose(hidden, hidden_ref, atol=2e-5, rtol=2e-5)

    print("KERNEL_OK")
</pallas_src>

<mosaic_0001>
module attributes {stable_mosaic.version = 11 : i64} {
  func.func @_gru_recurrent_kernel(%arg0: i32, %arg1: memref<8x3x2x32xf32, #tpu.memory_space<vmem>>, %arg2: memref<1x2x32xf32, #tpu.memory_space<vmem>>, %arg3: memref<3x32x32xf32, #tpu.memory_space<vmem>>, %arg4: memref<3x1x32xf32, #tpu.memory_space<vmem>>, %arg5: memref<8x2x32xf32, #tpu.memory_space<vmem>>, %arg6: memref<2x32xf32, #tpu.memory_space<vmem>>) attributes {dimension_semantics = [#tpu.dimension_semantics<arbitrary>], iteration_bounds = array<i64: 1>, scalar_prefetch = 0 : i64, scratch_operands = 1 : i64, tpu.core_type = #tpu.core_type<tc>, window_params = [{transform_indices = @transform_0, window_bounds = array<i64: 8, 3, 2, 32>}, {pipeline_mode = #tpu.pipeline_mode<synchronous>, transform_indices = @transform_1, window_bounds = array<i64: 1, 2, 32>}, {pipeline_mode = #tpu.pipeline_mode<synchronous>, transform_indices = @transform_2, window_bounds = array<i64: 3, 32, 32>}, {pipeline_mode = #tpu.pipeline_mode<synchronous>, transform_indices = @transform_3, window_bounds = array<i64: 3, 1, 32>}, {transform_indices = @transform_4, window_bounds = array<i64: 8, 2, 32>}]} {
    %c0_i32 = arith.constant 0 : i32
    %0 = arith.cmpi eq, %arg0, %c0_i32 : i32
    %1 = arith.extui %0 : i1 to i32
    %c0_i32_0 = arith.constant 0 : i32
    %2 = arith.cmpi ne, %1, %c0_i32_0 : i32
    scf.if %2 {
      %c0_108 = arith.constant 0 : index
      %c0_109 = arith.constant 0 : index
      %c0_110 = arith.constant 0 : index
      %353 = vector.load %arg2[%c0_108, %c0_109, %c0_110] : memref<1x2x32xf32, #tpu.memory_space<vmem>>, vector<1x2x32xf32>
      %354 = vector.shape_cast %353 : vector<1x2x32xf32> to vector<2x32xf32>
      %c0_111 = arith.constant 0 : index
      %c0_112 = arith.constant 0 : index
      %355 = vector.load %arg6[%c0_111, %c0_112] : memref<2x32xf32, #tpu.memory_space<vmem>>, vector<2x32xf32>
      tpu.vector_store %arg6[%c0_111, %c0_112], %354 {strides = array<i32>} : memref<2x32xf32, #tpu.memory_space<vmem>>, vector<2x32xf32>,
    } else {
    }
    %c0 = arith.constant 0 : index
    %c0_1 = arith.constant 0 : index
    %c0_2 = arith.constant 0 : index
    %3 = vector.load %arg3[%c0, %c0_1, %c0_2] : memref<3x32x32xf32, #tpu.memory_space<vmem>>, vector<1x32x32xf32>
    %4 = vector.shape_cast %3 : vector<1x32x32xf32> to vector<32x32xf32>
    %c1 = arith.constant 1 : index
    %c0_3 = arith.constant 0 : index
    %c0_4 = arith.constant 0 : index
    %5 = vector.load %arg3[%c1, %c0_3, %c0_4] : memref<3x32x32xf32, #tpu.memory_space<vmem>>, vector<1x32x32xf32>
    %6 = vector.shape_cast %5 : vector<1x32x32xf32> to vector<32x32xf32>
    %c2 = arith.constant 2 : index
    %c0_5 = arith.constant 0 : index
    %c0_6 = arith.constant 0 : index
    %7 = vector.load %arg3[%c2, %c0_5, %c0_6] : memref<3x32x32xf32, #tpu.memory_space<vmem>>, vector<1x32x32xf32>
    %8 = vector.shape_cast %7 : vector<1x32x32xf32> to vector<32x32xf32>
    %c0_7 = arith.constant 0 : index
    %c0_8 = arith.constant 0 : index
    %c0_9 = arith.constant 0 : index
    %9 = vector.load %arg4[%c0_7, %c0_8, %c0_9] : memref<3x1x32xf32, #tpu.memory_space<vmem>>, vector<1x1x32xf32>
    %10 = vector.shape_cast %9 : vector<1x1x32xf32> to vector<1x32xf32>
    %c1_10 = arith.constant 1 : index
    %c0_11 = arith.constant 0 : index
    %c0_12 = arith.constant 0 : index
    %11 = vector.load %arg4[%c1_10, %c0_11, %c0_12] : memref<3x1x32xf32, #tpu.memory_space<vmem>>, vector<1x1x32xf32>
    %12 = vector.shape_cast %11 : vector<1x1x32xf32> to vector<1x32xf32>
    %c2_13 = arith.constant 2 : index
    %c0_14 = arith.constant 0 : index
    %c0_15 = arith.constant 0 : index
    %13 = vector.load %arg4[%c2_13, %c0_14, %c0_15] : memref<3x1x32xf32, #tpu.memory_space<vmem>>, vector<1x1x32xf32>
    %14 = vector.shape_cast %13 : vector<1x1x32xf32> to vector<1x32xf32>
    %c0_16 = arith.constant 0 : index
    %c0_17 = arith.constant 0 : index
    %15 = vector.load %arg6[%c0_16, %c0_17] : memref<2x32xf32, #tpu.memory_space<vmem>>, vector<2x32xf32>
    %c0_i32_18 = arith.constant 0 : i32
    %16 = arith.index_cast %c0_i32_18 : i32 to index
    %c0_19 = arith.constant 0 : index
    %c0_20 = arith.constant 0 : index
    %c0_21 = arith.constant 0 : index
    %17 = vector.load %arg1[%16, %c0_19, %c0_20, %c0_21] : memref<8x3x2x32xf32, #tpu.memory_space<vmem>>, vector<1x3x2x32xf32>
    %18 = vector.shape_cast %17 : vector<1x3x2x32xf32> to vector<3x2x32xf32>
    %cst = arith.constant dense<0.000000e+00> : vector<2x32xf32>
    %19 = tpu.matmul %15, %4, %cst {dimension_numbers = #tpu.dot_dimension_numbers<[1], [0], [0], [1], [0, 0, 1, 1], [], []>} : vector<2x32xf32>, vector<32x32xf32>, vector<2x32xf32> -> vector<2x32xf32>
    %20 = vector.broadcast %10 : vector<1x32xf32> to vector<2x32xf32>
    %21 = arith.addf %19, %20 : vector<2x32xf32>
    %cst_22 = arith.constant dense<0.000000e+00> : vector<2x32xf32>
    %22 = tpu.matmul %15, %6, %cst_22 {dimension_numbers = #tpu.dot_dimension_numbers<[1], [0], [0], [1], [0, 0, 1, 1], [], []>} : vector<2x32xf32>, vector<32x32xf32>, vector<2x32xf32> -> vector<2x32xf32>
    %23 = vector.broadcast %12 : vector<1x32xf32> to vector<2x32xf32>
    %24 = arith.addf %22, %23 : vector<2x32xf32>
    %cst_23 = arith.constant dense<0.000000e+00> : vector<2x32xf32>
    %25 = tpu.matmul %15, %8, %cst_23 {dimension_numbers = #tpu.dot_dimension_numbers<[1], [0], [0], [1], [0, 0, 1, 1], [], []>} : vector<2x32xf32>, vector<32x32xf32>, vector<2x32xf32> -> vector<2x32xf32>
    %26 = vector.broadcast %14 : vector<1x32xf32> to vector<2x32xf32>
    %27 = arith.addf %25, %26 : vector<2x32xf32>
    %28 = vector.extract_strided_slice %18 {offsets = [0, 0, 0], sizes = [1, 2, 32], strides = [1, 1, 1]} : vector<3x2x32xf32> to vector<1x2x32xf32>
    %29 = vector.shape_cast %28 : vector<1x2x32xf32> to vector<2x32xf32>
    %30 = arith.addf %29, %21 : vector<2x32xf32>
    %31 = arith.negf %30 : vector<2x32xf32>
    %32 = math.exp %31 : vector<2x32xf32>
    %cst_24 = arith.constant 1.000000e+00 : f32
    %33 = vector.broadcast %cst_24 : f32 to vector<2x32xf32>
    %34 = arith.addf %33, %32 : vector<2x32xf32>
    %35 = arith.divf %33, %34 : vector<2x32xf32>
    %36 = vector.extract_strided_slice %18 {offsets = [1, 0, 0], sizes = [1, 2, 32], strides = [1, 1, 1]} : vector<3x2x32xf32> to vector<1x2x32xf32>
    %37 = vector.shape_cast %36 : vector<1x2x32xf32> to vector<2x32xf32>
    %38 = arith.addf %37, %24 : vector<2x32xf32>
    %39 = arith.negf %38 : vector<2x32xf32>
    %40 = math.exp %39 : vector<2x32xf32>
    %cst_25 = arith.constant 1.000000e+00 : f32
    %41 = vector.broadcast %cst_25 : f32 to vector<2x32xf32>
    %42 = arith.addf %41, %40 : vector<2x32xf32>
    %43 = arith.divf %41, %42 : vector<2x32xf32>
    %44 = vector.extract_strided_slice %18 {offsets = [2, 0, 0], sizes = [1, 2, 32], strides = [1, 1, 1]} : vector<3x2x32xf32> to vector<1x2x32xf32>
    %45 = vector.shape_cast %44 : vector<1x2x32xf32> to vector<2x32xf32>
    %46 = arith.mulf %35, %27 : vector<2x32xf32>
    %47 = arith.addf %45, %46 : vector<2x32xf32>
    %48 = math.tanh %47 : vector<2x32xf32>
    %cst_26 = arith.constant 1.000000e+00 : f32
    %49 = vector.broadcast %cst_26 : f32 to vector<2x32xf32>
    %50 = arith.subf %49, %43 : vector<2x32xf32>
    %51 = arith.mulf %50, %48 : vector<2x32xf32>
    %52 = arith.mulf %43, %15 : vector<2x32xf32>
    %53 = arith.addf %51, %52 : vector<2x32xf32>
    %54 = arith.index_cast %c0_i32_18 : i32 to index
    %c0_27 = arith.constant 0 : index
    %c0_28 = arith.constant 0 : index
    %55 = vector.load %arg5[%54, %c0_27, %c0_28] : memref<8x2x32xf32, #tpu.memory_space<vmem>>, vector<1x2x32xf32>
    %56 = vector.shape_cast %55 : vector<1x2x32xf32> to vector<2x32xf32>
    %57 = vector.shape_cast %53 : vector<2x32xf32> to vector<1x2x32xf32>
    tpu.vector_store %arg5[%54, %c0_27, %c0_28], %57 {strides = array<i32>} : memref<8x2x32xf32, #tpu.memory_space<vmem>>, vector<1x2x32xf32>,
    %c1_i32 = arith.constant 1 : i32
    %58 = arith.index_cast %c1_i32 : i32 to index
    %c0_29 = arith.constant 0 : index
    %c0_30 = arith.constant 0 : index
    %c0_31 = arith.constant 0 : index
    %59 = vector.load %arg1[%58, %c0_29, %c0_30, %c0_31] : memref<8x3x2x32xf32, #tpu.memory_space<vmem>>, vector<1x3x2x32xf32>
    %60 = vector.shape_cast %59 : vector<1x3x2x32xf32> to vector<3x2x32xf32>
    %cst_32 = arith.constant dense<0.000000e+00> : vector<2x32xf32>
    %61 = tpu.matmul %53, %4, %cst_32 {dimension_numbers = #tpu.dot_dimension_numbers<[1], [0], [0], [1], [0, 0, 1, 1], [], []>} : vector<2x32xf32>, vector<32x32xf32>, vector<2x32xf32> -> vector<2x32xf32>
    %62 = vector.broadcast %10 : vector<1x32xf32> to vector<2x32xf32>
    %63 = arith.addf %61, %62 : vector<2x32xf32>
    %cst_33 = arith.constant dense<0.000000e+00> : vector<2x32xf32>
    %64 = tpu.matmul %53, %6, %cst_33 {dimension_numbers = #tpu.dot_dimension_numbers<[1], [0], [0], [1], [0, 0, 1, 1], [], []>} : vector<2x32xf32>, vector<32x32xf32>, vector<2x32xf32> -> vector<2x32xf32>
    %65 = vector.broadcast %12 : vector<1x32xf32> to vector<2x32xf32>
    %66 = arith.addf %64, %65 : vector<2x32xf32>
    %cst_34 = arith.constant dense<0.000000e+00> : vector<2x32xf32>
    %67 = tpu.matmul %53, %8, %cst_34 {dimension_numbers = #tpu.dot_dimension_numbers<[1], [0], [0], [1], [0, 0, 1, 1], [], []>} : vector<2x32xf32>, vector<32x32xf32>, vector<2x32xf32> -> vector<2x32xf32>
    %68 = vector.broadcast %14 : vector<1x32xf32> to vector<2x32xf32>
    %69 = arith.addf %67, %68 : vector<2x32xf32>
    %70 = vector.extract_strided_slice %60 {offsets = [0, 0, 0], sizes = [1, 2, 32], strides = [1, 1, 1]} : vector<3x2x32xf32> to vector<1x2x32xf32>
    %71 = vector.shape_cast %70 : vector<1x2x32xf32> to vector<2x32xf32>
    %72 = arith.addf %71, %63 : vector<2x32xf32>
    %73 = arith.negf %72 : vector<2x32xf32>
    %74 = math.exp %73 : vector<2x32xf32>
    %cst_35 = arith.constant 1.000000e+00 : f32
    %75 = vector.broadcast %cst_35 : f32 to vector<2x32xf32>
    %76 = arith.addf %75, %74 : vector<2x32xf32>
    %77 = arith.divf %75, %76 : vector<2x32xf32>
    %78 = vector.extract_strided_slice %60 {offsets = [1, 0, 0], sizes = [1, 2, 32], strides = [1, 1, 1]} : vector<3x2x32xf32> to vector<1x2x32xf32>
    %79 = vector.shape_cast %78 : vector<1x2x32xf32> to vector<2x32xf32>
    %80 = arith.addf %79, %66 : vector<2x32xf32>
    %81 = arith.negf %80 : vector<2x32xf32>
    %82 = math.exp %81 : vector<2x32xf32>
    %cst_36 = arith.constant 1.000000e+00 : f32
    %83 = vector.broadcast %cst_36 : f32 to vector<2x32xf32>
    %84 = arith.addf %83, %82 : vector<2x32xf32>
    %85 = arith.divf %83, %84 : vector<2x32xf32>
    %86 = vector.extract_strided_slice %60 {offsets = [2, 0, 0], sizes = [1, 2, 32], strides = [1, 1, 1]} : vector<3x2x32xf32> to vector<1x2x32xf32>
    %87 = vector.shape_cast %86 : vector<1x2x32xf32> to vector<2x32xf32>
    %88 = arith.mulf %77, %69 : vector<2x32xf32>
    %89 = arith.addf %87, %88 : vector<2x32xf32>
    %90 = math.tanh %89 : vector<2x32xf32>
    %cst_37 = arith.constant 1.000000e+00 : f32
    %91 = vector.broadcast %cst_37 : f32 to vector<2x32xf32>
    %92 = arith.subf %91, %85 : vector<2x32xf32>
    %93 = arith.mulf %92, %90 : vector<2x32xf32>
    %94 = arith.mulf %85, %53 : vector<2x32xf32>
    %95 = arith.addf %93, %94 : vector<2x32xf32>
    %96 = arith.index_cast %c1_i32 : i32 to index
    %c0_38 = arith.constant 0 : index
    %c0_39 = arith.constant 0 : index
    %97 = vector.load %arg5[%96, %c0_38, %c0_39] : memref<8x2x32xf32, #tpu.memory_space<vmem>>, vector<1x2x32xf32>
    %98 = vector.shape_cast %97 : vector<1x2x32xf32> to vector<2x32xf32>
    %99 = vector.shape_cast %95 : vector<2x32xf32> to vector<1x2x32xf32>
    tpu.vector_store %arg5[%96, %c0_38, %c0_39], %99 {strides = array<i32>} : memref<8x2x32xf32, #tpu.memory_space<vmem>>, vector<1x2x32xf32>,
    %c2_i32 = arith.constant 2 : i32
    %100 = arith.index_cast %c2_i32 : i32 to index
    %c0_40 = arith.constant 0 : index
    %c0_41 = arith.constant 0 : index
    %c0_42 = arith.constant 0 : index
    %101 = vector.load %arg1[%100, %c0_40, %c0_41, %c0_42] : memref<8x3x2x32xf32, #tpu.memory_space<vmem>>, vector<1x3x2x32xf32>
    %102 = vector.shape_cast %101 : vector<1x3x2x32xf32> to vector<3x2x32xf32>
    %cst_43 = arith.constant dense<0.000000e+00> : vector<2x32xf32>
    %103 = tpu.matmul %95, %4, %cst_43 {dimension_numbers = #tpu.dot_dimension_numbers<[1], [0], [0], [1], [0, 0, 1, 1], [], []>} : vector<2x32xf32>, vector<32x32xf32>, vector<2x32xf32> -> vector<2x32xf32>
    %104 = vector.broadcast %10 : vector<1x32xf32> to vector<2x32xf32>
    %105 = arith.addf %103, %104 : vector<2x32xf32>
    %cst_44 = arith.constant dense<0.000000e+00> : vector<2x32xf32>
    %106 = tpu.matmul %95, %6, %cst_44 {dimension_numbers = #tpu.dot_dimension_numbers<[1], [0], [0], [1], [0, 0, 1, 1], [], []>} : vector<2x32xf32>, vector<32x32xf32>, vector<2x32xf32> -> vector<2x32xf32>
    %107 = vector.broadcast %12 : vector<1x32xf32> to vector<2x32xf32>
    %108 = arith.addf %106, %107 : vector<2x32xf32>
    %cst_45 = arith.constant dense<0.000000e+00> : vector<2x32xf32>
    %109 = tpu.matmul %95, %8, %cst_45 {dimension_numbers = #tpu.dot_dimension_numbers<[1], [0], [0], [1], [0, 0, 1, 1], [], []>} : vector<2x32xf32>, vector<32x32xf32>, vector<2x32xf32> -> vector<2x32xf32>
    %110 = vector.broadcast %14 : vector<1x32xf32> to vector<2x32xf32>
    %111 = arith.addf %109, %110 : vector<2x32xf32>
    %112 = vector.extract_strided_slice %102 {offsets = [0, 0, 0], sizes = [1, 2, 32], strides = [1, 1, 1]} : vector<3x2x32xf32> to vector<1x2x32xf32>
    %113 = vector.shape_cast %112 : vector<1x2x32xf32> to vector<2x32xf32>
    %114 = arith.addf %113, %105 : vector<2x32xf32>
    %115 = arith.negf %114 : vector<2x32xf32>
    %116 = math.exp %115 : vector<2x32xf32>
    %cst_46 = arith.constant 1.000000e+00 : f32
    %117 = vector.broadcast %cst_46 : f32 to vector<2x32xf32>
    %118 = arith.addf %117, %116 : vector<2x32xf32>
    %119 = arith.divf %117, %118 : vector<2x32xf32>
    %120 = vector.extract_strided_slice %102 {offsets = [1, 0, 0], sizes = [1, 2, 32], strides = [1, 1, 1]} : vector<3x2x32xf32> to vector<1x2x32xf32>
    %121 = vector.shape_cast %120 : vector<1x2x32xf32> to vector<2x32xf32>
    %122 = arith.addf %121, %108 : vector<2x32xf32>
    %123 = arith.negf %122 : vector<2x32xf32>
    %124 = math.exp %123 : vector<2x32xf32>
    %cst_47 = arith.constant 1.000000e+00 : f32
    %125 = vector.broadcast %cst_47 : f32 to vector<2x32xf32>
    %126 = arith.addf %125, %124 : vector<2x32xf32>
    %127 = arith.divf %125, %126 : vector<2x32xf32>
    %128 = vector.extract_strided_slice %102 {offsets = [2, 0, 0], sizes = [1, 2, 32], strides = [1, 1, 1]} : vector<3x2x32xf32> to vector<1x2x32xf32>
    %129 = vector.shape_cast %128 : vector<1x2x32xf32> to vector<2x32xf32>
    %130 = arith.mulf %119, %111 : vector<2x32xf32>
    %131 = arith.addf %129, %130 : vector<2x32xf32>
    %132 = math.tanh %131 : vector<2x32xf32>
    %cst_48 = arith.constant 1.000000e+00 : f32
    %133 = vector.broadcast %cst_48 : f32 to vector<2x32xf32>
    %134 = arith.subf %133, %127 : vector<2x32xf32>
    %135 = arith.mulf %134, %132 : vector<2x32xf32>
    %136 = arith.mulf %127, %95 : vector<2x32xf32>
    %137 = arith.addf %135, %136 : vector<2x32xf32>
    %138 = arith.index_cast %c2_i32 : i32 to index
    %c0_49 = arith.constant 0 : index
    %c0_50 = arith.constant 0 : index
    %139 = vector.load %arg5[%138, %c0_49, %c0_50] : memref<8x2x32xf32, #tpu.memory_space<vmem>>, vector<1x2x32xf32>
    %140 = vector.shape_cast %139 : vector<1x2x32xf32> to vector<2x32xf32>
    %141 = vector.shape_cast %137 : vector<2x32xf32> to vector<1x2x32xf32>
    tpu.vector_store %arg5[%138, %c0_49, %c0_50], %141 {strides = array<i32>} : memref<8x2x32xf32, #tpu.memory_space<vmem>>, vector<1x2x32xf32>,
    %c3_i32 = arith.constant 3 : i32
    %142 = arith.index_cast %c3_i32 : i32 to index
    %c0_51 = arith.constant 0 : index
    %c0_52 = arith.constant 0 : index
    %c0_53 = arith.constant 0 : index
    %143 = vector.load %arg1[%142, %c0_51, %c0_52, %c0_53] : memref<8x3x2x32xf32, #tpu.memory_space<vmem>>, vector<1x3x2x32xf32>
    %144 = vector.shape_cast %143 : vector<1x3x2x32xf32> to vector<3x2x32xf32>
    %cst_54 = arith.constant dense<0.000000e+00> : vector<2x32xf32>
    %145 = tpu.matmul %137, %4, %cst_54 {dimension_numbers = #tpu.dot_dimension_numbers<[1], [0], [0], [1], [0, 0, 1, 1], [], []>} : vector<2x32xf32>, vector<32x32xf32>, vector<2x32xf32> -> vector<2x32xf32>
    %146 = vector.broadcast %10 : vector<1x32xf32> to vector<2x32xf32>
    %147 = arith.addf %145, %146 : vector<2x32xf32>
    %cst_55 = arith.constant dense<0.000000e+00> : vector<2x32xf32>
    %148 = tpu.matmul %137, %6, %cst_55 {dimension_numbers = #tpu.dot_dimension_numbers<[1], [0], [0], [1], [0, 0, 1, 1], [], []>} : vector<2x32xf32>, vector<32x32xf32>, vector<2x32xf32> -> vector<2x32xf32>
    %149 = vector.broadcast %12 : vector<1x32xf32> to vector<2x32xf32>
    %150 = arith.addf %148, %149 : vector<2x32xf32>
    %cst_56 = arith.constant dense<0.000000e+00> : vector<2x32xf32>
    %151 = tpu.matmul %137, %8, %cst_56 {dimension_numbers = #tpu.dot_dimension_numbers<[1], [0], [0], [1], [0, 0, 1, 1], [], []>} : vector<2x32xf32>, vector<32x32xf32>, vector<2x32xf32> -> vector<2x32xf32>
    %152 = vector.broadcast %14 : vector<1x32xf32> to vector<2x32xf32>
    %153 = arith.addf %151, %152 : vector<2x32xf32>
    %154 = vector.extract_strided_slice %144 {offsets = [0, 0, 0], sizes = [1, 2, 32], strides = [1, 1, 1]} : vector<3x2x32xf32> to vector<1x2x32xf32>
    %155 = vector.shape_cast %154 : vector<1x2x32xf32> to vector<2x32xf32>
    %156 = arith.addf %155, %147 : vector<2x32xf32>
    %157 = arith.negf %156 : vector<2x32xf32>
    %158 = math.exp %157 : vector<2x32xf32>
    %cst_57 = arith.constant 1.000000e+00 : f32
    %159 = vector.broadcast %cst_57 : f32 to vector<2x32xf32>
    %160 = arith.addf %159, %158 : vector<2x32xf32>
    %161 = arith.divf %159, %160 : vector<2x32xf32>
    %162 = vector.extract_strided_slice %144 {offsets = [1, 0, 0], sizes = [1, 2, 32], strides = [1, 1, 1]} : vector<3x2x32xf32> to vector<1x2x32xf32>
    %163 = vector.shape_cast %162 : vector<1x2x32xf32> to vector<2x32xf32>
    %164 = arith.addf %163, %150 : vector<2x32xf32>
    %165 = arith.negf %164 : vector<2x32xf32>
    %166 = math.exp %165 : vector<2x32xf32>
    %cst_58 = arith.constant 1.000000e+00 : f32
    %167 = vector.broadcast %cst_58 : f32 to vector<2x32xf32>
    %168 = arith.addf %167, %166 : vector<2x32xf32>
    %169 = arith.divf %167, %168 : vector<2x32xf32>
    %170 = vector.extract_strided_slice %144 {offsets = [2, 0, 0], sizes = [1, 2, 32], strides = [1, 1, 1]} : vector<3x2x32xf32> to vector<1x2x32xf32>
    %171 = vector.shape_cast %170 : vector<1x2x32xf32> to vector<2x32xf32>
    %172 = arith.mulf %161, %153 : vector<2x32xf32>
    %173 = arith.addf %171, %172 : vector<2x32xf32>
    %174 = math.tanh %173 : vector<2x32xf32>
    %cst_59 = arith.constant 1.000000e+00 : f32
    %175 = vector.broadcast %cst_59 : f32 to vector<2x32xf32>
    %176 = arith.subf %175, %169 : vector<2x32xf32>
    %177 = arith.mulf %176, %174 : vector<2x32xf32>
    %178 = arith.mulf %169, %137 : vector<2x32xf32>
    %179 = arith.addf %177, %178 : vector<2x32xf32>
    %180 = arith.index_cast %c3_i32 : i32 to index
    %c0_60 = arith.constant 0 : index
    %c0_61 = arith.constant 0 : index
    %181 = vector.load %arg5[%180, %c0_60, %c0_61] : memref<8x2x32xf32, #tpu.memory_space<vmem>>, vector<1x2x32xf32>
    %182 = vector.shape_cast %181 : vector<1x2x32xf32> to vector<2x32xf32>
    %183 = vector.shape_cast %179 : vector<2x32xf32> to vector<1x2x32xf32>
    tpu.vector_store %arg5[%180, %c0_60, %c0_61], %183 {strides = array<i32>} : memref<8x2x32xf32, #tpu.memory_space<vmem>>, vector<1x2x32xf32>,
    %c4_i32 = arith.constant 4 : i32
    %184 = arith.index_cast %c4_i32 : i32 to index
    %c0_62 = arith.constant 0 : index
    %c0_63 = arith.constant 0 : index
    %c0_64 = arith.constant 0 : index
    %185 = vector.load %arg1[%184, %c0_62, %c0_63, %c0_64] : memref<8x3x2x32xf32, #tpu.memory_space<vmem>>, vector<1x3x2x32xf32>
    %186 = vector.shape_cast %185 : vector<1x3x2x32xf32> to vector<3x2x32xf32>
    %cst_65 = arith.constant dense<0.000000e+00> : vector<2x32xf32>
    %187 = tpu.matmul %179, %4, %cst_65 {dimension_numbers = #tpu.dot_dimension_numbers<[1], [0], [0], [1], [0, 0, 1, 1], [], []>} : vector<2x32xf32>, vector<32x32xf32>, vector<2x32xf32> -> vector<2x32xf32>
    %188 = vector.broadcast %10 : vector<1x32xf32> to vector<2x32xf32>
    %189 = arith.addf %187, %188 : vector<2x32xf32>
    %cst_66 = arith.constant dense<0.000000e+00> : vector<2x32xf32>
    %190 = tpu.matmul %179, %6, %cst_66 {dimension_numbers = #tpu.dot_dimension_numbers<[1], [0], [0], [1], [0, 0, 1, 1], [], []>} : vector<2x32xf32>, vector<32x32xf32>, vector<2x32xf32> -> vector<2x32xf32>
    %191 = vector.broadcast %12 : vector<1x32xf32> to vector<2x32xf32>
    %192 = arith.addf %190, %191 : vector<2x32xf32>
    %cst_67 = arith.constant dense<0.000000e+00> : vector<2x32xf32>
    %193 = tpu.matmul %179, %8, %cst_67 {dimension_numbers = #tpu.dot_dimension_numbers<[1], [0], [0], [1], [0, 0, 1, 1], [], []>} : vector<2x32xf32>, vector<32x32xf32>, vector<2x32xf32> -> vector<2x32xf32>
    %194 = vector.broadcast %14 : vector<1x32xf32> to vector<2x32xf32>
    %195 = arith.addf %193, %194 : vector<2x32xf32>
    %196 = vector.extract_strided_slice %186 {offsets = [0, 0, 0], sizes = [1, 2, 32], strides = [1, 1, 1]} : vector<3x2x32xf32> to vector<1x2x32xf32>
    %197 = vector.shape_cast %196 : vector<1x2x32xf32> to vector<2x32xf32>
    %198 = arith.addf %197, %189 : vector<2x32xf32>
    %199 = arith.negf %198 : vector<2x32xf32>
    %200 = math.exp %199 : vector<2x32xf32>
    %cst_68 = arith.constant 1.000000e+00 : f32
    %201 = vector.broadcast %cst_68 : f32 to vector<2x32xf32>
    %202 = arith.addf %201, %200 : vector<2x32xf32>
    %203 = arith.divf %201, %202 : vector<2x32xf32>
    %204 = vector.extract_strided_slice %186 {offsets = [1, 0, 0], sizes = [1, 2, 32], strides = [1, 1, 1]} : vector<3x2x32xf32> to vector<1x2x32xf32>
    %205 = vector.shape_cast %204 : vector<1x2x32xf32> to vector<2x32xf32>
    %206 = arith.addf %205, %192 : vector<2x32xf32>
    %207 = arith.negf %206 : vector<2x32xf32>
    %208 = math.exp %207 : vector<2x32xf32>
    %cst_69 = arith.constant 1.000000e+00 : f32
    %209 = vector.broadcast %cst_69 : f32 to vector<2x32xf32>
    %210 = arith.addf %209, %208 : vector<2x32xf32>
    %211 = arith.divf %209, %210 : vector<2x32xf32>
    %212 = vector.extract_strided_slice %186 {offsets = [2, 0, 0], sizes = [1, 2, 32], strides = [1, 1, 1]} : vector<3x2x32xf32> to vector<1x2x32xf32>
    %213 = vector.shape_cast %212 : vector<1x2x32xf32> to vector<2x32xf32>
    %214 = arith.mulf %203, %195 : vector<2x32xf32>
    %215 = arith.addf %213, %214 : vector<2x32xf32>
    %216 = math.tanh %215 : vector<2x32xf32>
    %cst_70 = arith.constant 1.000000e+00 : f32
    %217 = vector.broadcast %cst_70 : f32 to vector<2x32xf32>
    %218 = arith.subf %217, %211 : vector<2x32xf32>
    %219 = arith.mulf %218, %216 : vector<2x32xf32>
    %220 = arith.mulf %211, %179 : vector<2x32xf32>
    %221 = arith.addf %219, %220 : vector<2x32xf32>
    %222 = arith.index_cast %c4_i32 : i32 to index
    %c0_71 = arith.constant 0 : index
    %c0_72 = arith.constant 0 : index
    %223 = vector.load %arg5[%222, %c0_71, %c0_72] : memref<8x2x32xf32, #tpu.memory_space<vmem>>, vector<1x2x32xf32>
    %224 = vector.shape_cast %223 : vector<1x2x32xf32> to vector<2x32xf32>
    %225 = vector.shape_cast %221 : vector<2x32xf32> to vector<1x2x32xf32>
    tpu.vector_store %arg5[%222, %c0_71, %c0_72], %225 {strides = array<i32>} : memref<8x2x32xf32, #tpu.memory_space<vmem>>, vector<1x2x32xf32>,
    %c5_i32 = arith.constant 5 : i32
    %226 = arith.index_cast %c5_i32 : i32 to index
    %c0_73 = arith.constant 0 : index
    %c0_74 = arith.constant 0 : index
    %c0_75 = arith.constant 0 : index
    %227 = vector.load %arg1[%226, %c0_73, %c0_74, %c0_75] : memref<8x3x2x32xf32, #tpu.memory_space<vmem>>, vector<1x3x2x32xf32>
    %228 = vector.shape_cast %227 : vector<1x3x2x32xf32> to vector<3x2x32xf32>
    %cst_76 = arith.constant dense<0.000000e+00> : vector<2x32xf32>
    %229 = tpu.matmul %221, %4, %cst_76 {dimension_numbers = #tpu.dot_dimension_numbers<[1], [0], [0], [1], [0, 0, 1, 1], [], []>} : vector<2x32xf32>, vector<32x32xf32>, vector<2x32xf32> -> vector<2x32xf32>
    %230 = vector.broadcast %10 : vector<1x32xf32> to vector<2x32xf32>
    %231 = arith.addf %229, %230 : vector<2x32xf32>
    %cst_77 = arith.constant dense<0.000000e+00> : vector<2x32xf32>
    %232 = tpu.matmul %221, %6, %cst_77 {dimension_numbers = #tpu.dot_dimension_numbers<[1], [0], [0], [1], [0, 0, 1, 1], [], []>} : vector<2x32xf32>, vector<32x32xf32>, vector<2x32xf32> -> vector<2x32xf32>
    %233 = vector.broadcast %12 : vector<1x32xf32> to vector<2x32xf32>
    %234 = arith.addf %232, %233 : vector<2x32xf32>
    %cst_78 = arith.constant dense<0.000000e+00> : vector<2x32xf32>
    %235 = tpu.matmul %221, %8, %cst_78 {dimension_numbers = #tpu.dot_dimension_numbers<[1], [0], [0], [1], [0, 0, 1, 1], [], []>} : vector<2x32xf32>, vector<32x32xf32>, vector<2x32xf32> -> vector<2x32xf32>
    %236 = vector.broadcast %14 : vector<1x32xf32> to vector<2x32xf32>
    %237 = arith.addf %235, %236 : vector<2x32xf32>
    %238 = vector.extract_strided_slice %228 {offsets = [0, 0, 0], sizes = [1, 2, 32], strides = [1, 1, 1]} : vector<3x2x32xf32> to vector<1x2x32xf32>
    %239 = vector.shape_cast %238 : vector<1x2x32xf32> to vector<2x32xf32>
    %240 = arith.addf %239, %231 : vector<2x32xf32>
    %241 = arith.negf %240 : vector<2x32xf32>
    %242 = math.exp %241 : vector<2x32xf32>
    %cst_79 = arith.constant 1.000000e+00 : f32
    %243 = vector.broadcast %cst_79 : f32 to vector<2x32xf32>
    %244 = arith.addf %243, %242 : vector<2x32xf32>
    %245 = arith.divf %243, %244 : vector<2x32xf32>
    %246 = vector.extract_strided_slice %228 {offsets = [1, 0, 0], sizes = [1, 2, 32], strides = [1, 1, 1]} : vector<3x2x32xf32> to vector<1x2x32xf32>
    %247 = vector.shape_cast %246 : vector<1x2x32xf32> to vector<2x32xf32>
    %248 = arith.addf %247, %234 : vector<2x32xf32>
    %249 = arith.negf %248 : vector<2x32xf32>
    %250 = math.exp %249 : vector<2x32xf32>
    %cst_80 = arith.constant 1.000000e+00 : f32
    %251 = vector.broadcast %cst_80 : f32 to vector<2x32xf32>
    %252 = arith.addf %251, %250 : vector<2x32xf32>
    %253 = arith.divf %251, %252 : vector<2x32xf32>
    %254 = vector.extract_strided_slice %228 {offsets = [2, 0, 0], sizes = [1, 2, 32], strides = [1, 1, 1]} : vector<3x2x32xf32> to vector<1x2x32xf32>
    %255 = vector.shape_cast %254 : vector<1x2x32xf32> to vector<2x32xf32>
    %256 = arith.mulf %245, %237 : vector<2x32xf32>
    %257 = arith.addf %255, %256 : vector<2x32xf32>
    %258 = math.tanh %257 : vector<2x32xf32>
    %cst_81 = arith.constant 1.000000e+00 : f32
    %259 = vector.broadcast %cst_81 : f32 to vector<2x32xf32>
    %260 = arith.subf %259, %253 : vector<2x32xf32>
    %261 = arith.mulf %260, %258 : vector<2x32xf32>
    %262 = arith.mulf %253, %221 : vector<2x32xf32>
    %263 = arith.addf %261, %262 : vector<2x32xf32>
    %264 = arith.index_cast %c5_i32 : i32 to index
    %c0_82 = arith.constant 0 : index
    %c0_83 = arith.constant 0 : index
    %265 = vector.load %arg5[%264, %c0_82, %c0_83] : memref<8x2x32xf32, #tpu.memory_space<vmem>>, vector<1x2x32xf32>
    %266 = vector.shape_cast %265 : vector<1x2x32xf32> to vector<2x32xf32>
    %267 = vector.shape_cast %263 : vector<2x32xf32> to vector<1x2x32xf32>
    tpu.vector_store %arg5[%264, %c0_82, %c0_83], %267 {strides = array<i32>} : memref<8x2x32xf32, #tpu.memory_space<vmem>>, vector<1x2x32xf32>,
    %c6_i32 = arith.constant 6 : i32
    %268 = arith.index_cast %c6_i32 : i32 to index
    %c0_84 = arith.constant 0 : index
    %c0_85 = arith.constant 0 : index
    %c0_86 = arith.constant 0 : index
    %269 = vector.load %arg1[%268, %c0_84, %c0_85, %c0_86] : memref<8x3x2x32xf32, #tpu.memory_space<vmem>>, vector<1x3x2x32xf32>
    %270 = vector.shape_cast %269 : vector<1x3x2x32xf32> to vector<3x2x32xf32>
    %cst_87 = arith.constant dense<0.000000e+00> : vector<2x32xf32>
    %271 = tpu.matmul %263, %4, %cst_87 {dimension_numbers = #tpu.dot_dimension_numbers<[1], [0], [0], [1], [0, 0, 1, 1], [], []>} : vector<2x32xf32>, vector<32x32xf32>, vector<2x32xf32> -> vector<2x32xf32>
    %272 = vector.broadcast %10 : vector<1x32xf32> to vector<2x32xf32>
    %273 = arith.addf %271, %272 : vector<2x32xf32>
    %cst_88 = arith.constant dense<0.000000e+00> : vector<2x32xf32>
    %274 = tpu.matmul %263, %6, %cst_88 {dimension_numbers = #tpu.dot_dimension_numbers<[1], [0], [0], [1], [0, 0, 1, 1], [], []>} : vector<2x32xf32>, vector<32x32xf32>, vector<2x32xf32> -> vector<2x32xf32>
    %275 = vector.broadcast %12 : vector<1x32xf32> to vector<2x32xf32>
    %276 = arith.addf %274, %275 : vector<2x32xf32>
    %cst_89 = arith.constant dense<0.000000e+00> : vector<2x32xf32>
    %277 = tpu.matmul %263, %8, %cst_89 {dimension_numbers = #tpu.dot_dimension_numbers<[1], [0], [0], [1], [0, 0, 1, 1], [], []>} : vector<2x32xf32>, vector<32x32xf32>, vector<2x32xf32> -> vector<2x32xf32>
    %278 = vector.broadcast %14 : vector<1x32xf32> to vector<2x32xf32>
    %279 = arith.addf %277, %278 : vector<2x32xf32>
    %280 = vector.extract_strided_slice %270 {offsets = [0, 0, 0], sizes = [1, 2, 32], strides = [1, 1, 1]} : vector<3x2x32xf32> to vector<1x2x32xf32>
    %281 = vector.shape_cast %280 : vector<1x2x32xf32> to vector<2x32xf32>
    %282 = arith.addf %281, %273 : vector<2x32xf32>
    %283 = arith.negf %282 : vector<2x32xf32>
    %284 = math.exp %283 : vector<2x32xf32>
    %cst_90 = arith.constant 1.000000e+00 : f32
    %285 = vector.broadcast %cst_90 : f32 to vector<2x32xf32>
    %286 = arith.addf %285, %284 : vector<2x32xf32>
    %287 = arith.divf %285, %286 : vector<2x32xf32>
    %288 = vector.extract_strided_slice %270 {offsets = [1, 0, 0], sizes = [1, 2, 32], strides = [1, 1, 1]} : vector<3x2x32xf32> to vector<1x2x32xf32>
    %289 = vector.shape_cast %288 : vector<1x2x32xf32> to vector<2x32xf32>
    %290 = arith.addf %289, %276 : vector<2x32xf32>
    %291 = arith.negf %290 : vector<2x32xf32>
    %292 = math.exp %291 : vector<2x32xf32>
    %cst_91 = arith.constant 1.000000e+00 : f32
    %293 = vector.broadcast %cst_91 : f32 to vector<2x32xf32>
    %294 = arith.addf %293, %292 : vector<2x32xf32>
    %295 = arith.divf %293, %294 : vector<2x32xf32>
    %296 = vector.extract_strided_slice %270 {offsets = [2, 0, 0], sizes = [1, 2, 32], strides = [1, 1, 1]} : vector<3x2x32xf32> to vector<1x2x32xf32>
    %297 = vector.shape_cast %296 : vector<1x2x32xf32> to vector<2x32xf32>
    %298 = arith.mulf %287, %279 : vector<2x32xf32>
    %299 = arith.addf %297, %298 : vector<2x32xf32>
    %300 = math.tanh %299 : vector<2x32xf32>
    %cst_92 = arith.constant 1.000000e+00 : f32
    %301 = vector.broadcast %cst_92 : f32 to vector<2x32xf32>
    %302 = arith.subf %301, %295 : vector<2x32xf32>
    %303 = arith.mulf %302, %300 : vector<2x32xf32>
    %304 = arith.mulf %295, %263 : vector<2x32xf32>
    %305 = arith.addf %303, %304 : vector<2x32xf32>
    %306 = arith.index_cast %c6_i32 : i32 to index
    %c0_93 = arith.constant 0 : index
    %c0_94 = arith.constant 0 : index
    %307 = vector.load %arg5[%306, %c0_93, %c0_94] : memref<8x2x32xf32, #tpu.memory_space<vmem>>, vector<1x2x32xf32>
    %308 = vector.shape_cast %307 : vector<1x2x32xf32> to vector<2x32xf32>
    %309 = vector.shape_cast %305 : vector<2x32xf32> to vector<1x2x32xf32>
    tpu.vector_store %arg5[%306, %c0_93, %c0_94], %309 {strides = array<i32>} : memref<8x2x32xf32, #tpu.memory_space<vmem>>, vector<1x2x32xf32>,
    %c7_i32 = arith.constant 7 : i32
    %310 = arith.index_cast %c7_i32 : i32 to index
    %c0_95 = arith.constant 0 : index
    %c0_96 = arith.constant 0 : index
    %c0_97 = arith.constant 0 : index
    %311 = vector.load %arg1[%310, %c0_95, %c0_96, %c0_97] : memref<8x3x2x32xf32, #tpu.memory_space<vmem>>, vector<1x3x2x32xf32>
    %312 = vector.shape_cast %311 : vector<1x3x2x32xf32> to vector<3x2x32xf32>
    %cst_98 = arith.constant dense<0.000000e+00> : vector<2x32xf32>
    %313 = tpu.matmul %305, %4, %cst_98 {dimension_numbers = #tpu.dot_dimension_numbers<[1], [0], [0], [1], [0, 0, 1, 1], [], []>} : vector<2x32xf32>, vector<32x32xf32>, vector<2x32xf32> -> vector<2x32xf32>
    %314 = vector.broadcast %10 : vector<1x32xf32> to vector<2x32xf32>
    %315 = arith.addf %313, %314 : vector<2x32xf32>
    %cst_99 = arith.constant dense<0.000000e+00> : vector<2x32xf32>
    %316 = tpu.matmul %305, %6, %cst_99 {dimension_numbers = #tpu.dot_dimension_numbers<[1], [0], [0], [1], [0, 0, 1, 1], [], []>} : vector<2x32xf32>, vector<32x32xf32>, vector<2x32xf32> -> vector<2x32xf32>
    %317 = vector.broadcast %12 : vector<1x32xf32> to vector<2x32xf32>
    %318 = arith.addf %316, %317 : vector<2x32xf32>
    %cst_100 = arith.constant dense<0.000000e+00> : vector<2x32xf32>
    %319 = tpu.matmul %305, %8, %cst_100 {dimension_numbers = #tpu.dot_dimension_numbers<[1], [0], [0], [1], [0, 0, 1, 1], [], []>} : vector<2x32xf32>, vector<32x32xf32>, vector<2x32xf32> -> vector<2x32xf32>
    %320 = vector.broadcast %14 : vector<1x32xf32> to vector<2x32xf32>
    %321 = arith.addf %319, %320 : vector<2x32xf32>
    %322 = vector.extract_strided_slice %312 {offsets = [0, 0, 0], sizes = [1, 2, 32], strides = [1, 1, 1]} : vector<3x2x32xf32> to vector<1x2x32xf32>
    %323 = vector.shape_cast %322 : vector<1x2x32xf32> to vector<2x32xf32>
    %324 = arith.addf %323, %315 : vector<2x32xf32>
    %325 = arith.negf %324 : vector<2x32xf32>
    %326 = math.exp %325 : vector<2x32xf32>
    %cst_101 = arith.constant 1.000000e+00 : f32
    %327 = vector.broadcast %cst_101 : f32 to vector<2x32xf32>
    %328 = arith.addf %327, %326 : vector<2x32xf32>
    %329 = arith.divf %327, %328 : vector<2x32xf32>
    %330 = vector.extract_strided_slice %312 {offsets = [1, 0, 0], sizes = [1, 2, 32], strides = [1, 1, 1]} : vector<3x2x32xf32> to vector<1x2x32xf32>
    %331 = vector.shape_cast %330 : vector<1x2x32xf32> to vector<2x32xf32>
    %332 = arith.addf %331, %318 : vector<2x32xf32>
    %333 = arith.negf %332 : vector<2x32xf32>
    %334 = math.exp %333 : vector<2x32xf32>
    %cst_102 = arith.constant 1.000000e+00 : f32
    %335 = vector.broadcast %cst_102 : f32 to vector<2x32xf32>
    %336 = arith.addf %335, %334 : vector<2x32xf32>
    %337 = arith.divf %335, %336 : vector<2x32xf32>
    %338 = vector.extract_strided_slice %312 {offsets = [2, 0, 0], sizes = [1, 2, 32], strides = [1, 1, 1]} : vector<3x2x32xf32> to vector<1x2x32xf32>
    %339 = vector.shape_cast %338 : vector<1x2x32xf32> to vector<2x32xf32>
    %340 = arith.mulf %329, %321 : vector<2x32xf32>
    %341 = arith.addf %339, %340 : vector<2x32xf32>
    %342 = math.tanh %341 : vector<2x32xf32>
    %cst_103 = arith.constant 1.000000e+00 : f32
    %343 = vector.broadcast %cst_103 : f32 to vector<2x32xf32>
    %344 = arith.subf %343, %337 : vector<2x32xf32>
    %345 = arith.mulf %344, %342 : vector<2x32xf32>
    %346 = arith.mulf %337, %305 : vector<2x32xf32>
    %347 = arith.addf %345, %346 : vector<2x32xf32>
    %348 = arith.index_cast %c7_i32 : i32 to index
    %c0_104 = arith.constant 0 : index
    %c0_105 = arith.constant 0 : index
    %349 = vector.load %arg5[%348, %c0_104, %c0_105] : memref<8x2x32xf32, #tpu.memory_space<vmem>>, vector<1x2x32xf32>
    %350 = vector.shape_cast %349 : vector<1x2x32xf32> to vector<2x32xf32>
    %351 = vector.shape_cast %347 : vector<2x32xf32> to vector<1x2x32xf32>
    tpu.vector_store %arg5[%348, %c0_104, %c0_105], %351 {strides = array<i32>} : memref<8x2x32xf32, #tpu.memory_space<vmem>>, vector<1x2x32xf32>,
    %c8_i32 = arith.constant 8 : i32
    %c0_106 = arith.constant 0 : index
    %c0_107 = arith.constant 0 : index
    %352 = vector.load %arg6[%c0_106, %c0_107] : memref<2x32xf32, #tpu.memory_space<vmem>>, vector<2x32xf32>
    tpu.vector_store %arg6[%c0_106, %c0_107], %347 {strides = array<i32>} : memref<2x32xf32, #tpu.memory_space<vmem>>, vector<2x32xf32>,
    return
  }
  func.func @transform_0(%arg0: i32) -> (i32, i32, i32, i32) {
    %c0_i32 = arith.constant 0 : i32
    %c0_i32_0 = arith.constant 0 : i32
    %c0_i32_1 = arith.constant 0 : i32
    %c0_i32_2 = arith.constant 0 : i32
    return %arg0, %c0_i32, %c0_i32_0, %c0_i32_1 : i32, i32, i32, i32
  }
  func.func @transform_1(%arg0: i32) -> (i32, i32, i32) {
    %c0_i32 = arith.constant 0 : i32
    %c0_i32_0 = arith.constant 0 : i32
    %c0_i32_1 = arith.constant 0 : i32
    %c0_i32_2 = arith.constant 0 : i32
    return %c0_i32, %c0_i32_0, %c0_i32_1 : i32, i32, i32
  }
  func.func @transform_2(%arg0: i32) -> (i32, i32, i32) {
    %c0_i32 = arith.constant 0 : i32
    %c0_i32_0 = arith.constant 0 : i32
    %c0_i32_1 = arith.constant 0 : i32
    %c0_i32_2 = arith.constant 0 : i32
    return %c0_i32, %c0_i32_0, %c0_i32_1 : i32, i32, i32
  }
  func.func @transform_3(%arg0: i32) -> (i32, i32, i32) {
    %c0_i32 = arith.constant 0 : i32
    %c0_i32_0 = arith.constant 0 : i32
    %c0_i32_1 = arith.constant 0 : i32
    %c0_i32_2 = arith.constant 0 : i32
    return %c0_i32, %c0_i32_0, %c0_i32_1 : i32, i32, i32
  }
  func.func @transform_4(%arg0: i32) -> (i32, i32, i32) {
    %c0_i32 = arith.constant 0 : i32
    %c0_i32_0 = arith.constant 0 : i32
    %c0_i32_1 = arith.constant 0 : i32
    return %arg0, %c0_i32, %c0_i32_0 : i32, i32, i32
  }
}

</mosaic_0001>

<llo_original>
// kernel: tpu_custom_call.1
$region0: #{tpu_custom_call.1}
  #allocation0 [shape = 'u32[]', space=smem, size = 0x4, offset = 0x4, fixed_abs, tag = 'smem constant byte address 0x4 - core index']
  #allocation1 [shape = 'u32[144,128]{1,0:T(1,128)}', space=vmem, size = 0x12000, scoped, tag = 'internal scratch']
  #allocation2 [shape = 'f32[2,32]{1,0:T(2,128)}', space=vmem, size = 0x400, scoped, tag = 'scratch operand']
  %s0 = inlined_call_operand.hbm [shape: f32[8,3,2,32], index: 0, kind: input, shape index: {}]
  %s1 = inlined_call_operand.vmem [shape: f32[1,2,32], index: 1, kind: input, shape index: {}]
  %s2 = inlined_call_operand.hbm [shape: f32[3,32,32], index: 2, kind: input, shape index: {}]
  %s3 = inlined_call_operand.vmem [shape: f32[3,1,32], index: 3, kind: input, shape index: {}]
  %s4 = inlined_call_operand.hbm [shape: f32[8,2,32], index: 4, kind: output, shape index: {}]
  %s5 = sld [smem:[#allocation0]]
  $region38: #{tpu_custom_call.1} parent=0
    _
  %s7 = ssub.s32 1, %s5
  %s8 = scalar_select 0, %s7, %s5
  $region1: #{tpu_custom_call.1} parent=0
    #allocation3 [shape = 'u8[24576]{0}', space=vmem, size = 0x6000, scoped, tag = 'input window, operand 0, single buffered']
    #allocation4 [shape = 's32[1]{0}', space=sflag, size = 0x4, scoped, tag = 'scoped memory for tpu_custom_call.1']
    #allocation5 [shape = 's32[1]{0}', space=sflag, size = 0x4, scoped, tag = 'scoped memory for tpu_custom_call.1']
    #allocation6 [shape = 'u8[49152]{0}', space=vmem, size = 0xc000, scoped, tag = 'input window, operand 2, single buffered']
    #allocation7 [shape = 's32[1]{0}', space=sflag, size = 0x4, scoped, tag = 'scoped memory for tpu_custom_call.1']
    #allocation8 [shape = 'u8[8192]{0}', space=vmem, size = 0x2000, scoped, tag = 'output window, operand 0, single buffered']
    %9 = vsyncpa [#allocation4], 0
    %10 = vsyncpa [#allocation7], 0
    %11 = vsyncpa [#allocation5], 0
    // Predicated region
    $region2: #{tpu_custom_call.1} parent=1 // pred_check
      _
    $region3: #{tpu_custom_call.1} parent=1 // pred_check_branch
      %13 = sbr.rel (0) target = $region5
    $region4: #{tpu_custom_call.1} parent=1 // pred_region
      %s15 = ssub.s32 768, 768
      %16 = vsyncadd [#allocation4], %s15
      %s17 = sshll.u32 [#allocation3], 4
      %s18 = int_to_ptr.vmem [resolvable:$true] %s17
      %23 = dma.hbm_to_vmem [thread:$0]  %s0, 768, %s18, [#allocation4], 32, 32, 2
    $region5: #{tpu_custom_call.1} parent=1 // pred_fallthru
      _
    // Predicated region
    $region6: #{tpu_custom_call.1} parent=1 // pred_check
      _
    $region7: #{tpu_custom_call.1} parent=1 // pred_check_branch
      %25 = sbr.rel (0) target = $region9
    $region8: #{tpu_custom_call.1} parent=1 // pred_region
      _
    $region9: #{tpu_custom_call.1} parent=1 // pred_fallthru
      _
    // Predicated region
    $region10: #{tpu_custom_call.1} parent=1 // pred_check
      _
    $region11: #{tpu_custom_call.1} parent=1 // pred_check_branch
      %27 = sbr.rel (0) target = $region13
    $region12: #{tpu_custom_call.1} parent=1 // pred_region
      %s29 = ssub.s32 1536, 1536
      %30 = vsyncadd [#allocation7], %s29
      %s31 = sshll.u32 [#allocation6], 4
      %s32 = int_to_ptr.vmem [resolvable:$true] %s31
      %37 = dma.hbm_to_vmem [thread:$0]  %s2, 1536, %s32, [#allocation7], 128, 128, 8
    $region13: #{tpu_custom_call.1} parent=1 // pred_fallthru
      _
    // Predicated region
    $region14: #{tpu_custom_call.1} parent=1 // pred_check
      _
    $region15: #{tpu_custom_call.1} parent=1 // pred_check_branch
      %39 = sbr.rel (0) target = $region17
    $region16: #{tpu_custom_call.1} parent=1 // pred_region
      _
    $region17: #{tpu_custom_call.1} parent=1 // pred_fallthru
      _
    // Predicated region
    $region18: #{tpu_custom_call.1} parent=1 // pred_check
      _
    $region19: #{tpu_custom_call.1} parent=1 // pred_check_branch
      %41 = sbr.rel (0) target = $region21
    $region20: #{tpu_custom_call.1} parent=1 // pred_region
      %42 = dma.done [#allocation4], 768
    $region21: #{tpu_custom_call.1} parent=1 // pred_fallthru
      _
    // Predicated region
    $region22: #{tpu_custom_call.1} parent=1 // pred_check
      _
    $region23: #{tpu_custom_call.1} parent=1 // pred_check_branch
      %44 = sbr.rel (0) target = $region25
    $region24: #{tpu_custom_call.1} parent=1 // pred_region
      %45 = dma.done [#allocation7], 1536
    $region25: #{tpu_custom_call.1} parent=1 // pred_fallthru
      _
    %p46 = scmp.eq.s32.totalorder 0, 0
    // Predicated region
    $region26: #{tpu_custom_call.1} parent=1 // pred_check
      %p47 = pneg %p46
    $region27: #{tpu_custom_call.1} parent=1 // pred_check_branch
      %49 = sbr.rel (%p47) target = $region29
    $region28: #{tpu_custom_call.1} parent=1 // pred_region
      %v50 = vld [vmem:[%s1] sm:$0x3]
      %vm51 = vcmask 254976
      %52 = vst.msk [vmem:[#allocation2] sm:$0x3] %vm51, %v50
    $region29: #{tpu_custom_call.1} parent=1 // pred_fallthru
      _
    %v53 = vld [vmem:[#allocation6] sm:$0xff]
    %v54 = vld [vmem:[#allocation6 + $0x8] sm:$0xff]
    %v55 = vld [vmem:[#allocation6 + $0x10] sm:$0xff]
    %v56 = vld [vmem:[#allocation6 + $0x18] sm:$0xff]
    %s57 = scalar_lea.vmem [#allocation6], 32
    %v58 = vld [vmem:[%s57] sm:$0xff]
    %v59 = vld [vmem:[%s57 + $0x8] sm:$0xff]
    %v60 = vld [vmem:[%s57 + $0x10] sm:$0xff]
    %v61 = vld [vmem:[%s57 + $0x18] sm:$0xff]
    %s62 = scalar_lea.vmem [#allocation6], 64
    %v63 = vld [vmem:[%s62] sm:$0xff]
    %v64 = vld [vmem:[%s62 + $0x8] sm:$0xff]
    %v65 = vld [vmem:[%s62 + $0x10] sm:$0xff]
    %v66 = vld [vmem:[%s62 + $0x18] sm:$0xff]
    %v67 = vld [vmem:[%s3] sm:$0x1]
    %s68 = scalar_lea.vmem %s3, 1
    %v69 = vld [vmem:[%s68] sm:$0x1]
    %s70 = scalar_lea.vmem %s3, 2
    %v71 = vld [vmem:[%s70] sm:$0x1]
    %v72 = vld [vmem:[#allocation2] sm:$0x3]
    %v73 = vld [vmem:[#allocation3] sm:$0x3]
    %v74 = vld [vmem:[#allocation3 + $0x2] sm:$0x3]
    %v75 = vld [vmem:[#allocation3 + $0x4] sm:$0x3]
    %v77 = vlaneseq
    %v78 = vshrl.u32 %v77, 7
    %v79 = vsub.s32 0, %v78
    %v80 = vrot.slane %v67, %v79
    %vm82 = vcmask 261120
    %v84 = vsel %vm82, %v72, 0
    %86 = vmatprep.subr.mxu0 0.0
    %87 = vmatpush1.msra.mxu0 %v53
    %88 = vmatprep.subr.mxu0 0.0
    %89 = vmatpush1.msra.mxu0 %v54
    %90 = vmatprep.subr.mxu0 0.0
    %91 = vmatpush1.msra.mxu0 %v55
    %92 = vmatprep.subr.mxu0 0.0
    %93 = vmatpush1.msra.mxu0 %v56
    %94 = vmatprep.subr.mxu0 0.0
    %95 = vmatpush1.msra.mxu0 0.0
    %96 = vmatprep.subr.mxu0 0.0
    %97 = vmatpush1.msra.mxu0 0.0
    %98 = vmatprep.subr.mxu0 0.0
    %99 = vmatpush1.msra.mxu0 0.0
    %100 = vmatprep.subr.mxu0 0.0
    %101 = vmatpush1.msra.mxu0 0.0
    %102 = vmatprep.subr.mxu0 0.0
    %103 = vmatpush1.msra.mxu0 0.0
    %104 = vmatprep.subr.mxu0 0.0
    %105 = vmatpush1.msra.mxu0 0.0
    %106 = vmatprep.subr.mxu0 0.0
    %107 = vmatpush1.msra.mxu0 0.0
    %108 = vmatprep.subr.mxu0 0.0
    %109 = vmatpush1.msra.mxu0 0.0
    %110 = vmatprep.subr.mxu0 0.0
    %111 = vmatpush1.msra.mxu0 0.0
    %112 = vmatprep.subr.mxu0 0.0
    %113 = vmatpush1.msra.mxu0 0.0
    %114 = vmatprep.subr.mxu0 0.0
    %115 = vmatpush1.msra.mxu0 0.0
    %116 = vmatprep.subr.mxu0 0.0
    %117 = vmatpush1.msra.mxu0 0.0
    %118 = vmatprep.subr.mxu0 0.0
    %119 = vmatpush1.msra.mxu0 0.0
    %120 = vmatprep.subr.mxu0 0.0
    %121 = vmatpush1.msra.mxu0 0.0
    %122 = vmatprep.subr.mxu0 0.0
    %123 = vmatpush1.msra.mxu0 0.0
    %124 = vmatprep.subr.mxu0 0.0
    %125 = vmatpush1.msra.mxu0 0.0
    %126 = vmatprep.subr.mxu0 0.0
    %127 = vmatpush1.msra.mxu0 0.0
    %128 = vmatprep.subr.mxu0 0.0
    %129 = vmatpush1.msra.mxu0 0.0
    %130 = vmatprep.subr.mxu0 0.0
    %131 = vmatpush1.msra.mxu0 0.0
    %132 = vmatprep.subr.mxu0 0.0
    %133 = vmatpush1.msra.mxu0 0.0
    %134 = vmatprep.subr.mxu0 0.0
    %135 = vmatpush1.msra.mxu0 0.0
    %136 = vmatprep.subr.mxu0 0.0
    %137 = vmatpush1.msra.mxu0 0.0
    %138 = vmatprep.subr.mxu0 0.0
    %139 = vmatpush1.msra.mxu0 0.0
    %140 = vmatprep.subr.mxu0 0.0
    %141 = vmatpush1.msra.mxu0 0.0
    %142 = vmatprep.subr.mxu0 0.0
    %143 = vmatpush1.msra.mxu0 0.0
    %144 = vmatprep.subr.mxu0 0.0
    %145 = vmatpush1.msra.mxu0 0.0
    %146 = vmatprep.subr.mxu0 0.0
    %147 = vmatpush1.msra.mxu0 0.0
    %148 = vmatprep.subr.mxu0 0.0
    %149 = vmatpush1.msra.mxu0 0.0
    %150 = vmatprep.mubr.f32.mxu0 0.0
    %151 = vmatmul.mubr.f32.gmra.mrb[0].mxu0 %v84
    %v152 = vpop.f32.mrb[0].mxu0
    %v153 = vadd.f32 %v80, %v152
    %v154 = vpop.f32.mrb[0].mxu0
    %155 = vdwg.mxu0
    %v157 = vlaneseq
    %v158 = vshrl.u32 %v157, 7
    %v159 = vsub.s32 0, %v158
    %v160 = vrot.slane %v69, %v159
    %162 = vmatprep.subr.mxu0 0.0
    %163 = vmatpush1.msra.mxu0 %v58
    %164 = vmatprep.subr.mxu0 0.0
    %165 = vmatpush1.msra.mxu0 %v59
    %166 = vmatprep.subr.mxu0 0.0
    %167 = vmatpush1.msra.mxu0 %v60
    %168 = vmatprep.subr.mxu0 0.0
    %169 = vmatpush1.msra.mxu0 %v61
    %170 = vmatprep.subr.mxu0 0.0
    %171 = vmatpush1.msra.mxu0 0.0
    %172 = vmatprep.subr.mxu0 0.0
    %173 = vmatpush1.msra.mxu0 0.0
    %174 = vmatprep.subr.mxu0 0.0
    %175 = vmatpush1.msra.mxu0 0.0
    %176 = vmatprep.subr.mxu0 0.0
    %177 = vmatpush1.msra.mxu0 0.0
    %178 = vmatprep.subr.mxu0 0.0
    %179 = vmatpush1.msra.mxu0 0.0
    %180 = vmatprep.subr.mxu0 0.0
    %181 = vmatpush1.msra.mxu0 0.0
    %182 = vmatprep.subr.mxu0 0.0
    %183 = vmatpush1.msra.mxu0 0.0
    %184 = vmatprep.subr.mxu0 0.0
    %185 = vmatpush1.msra.mxu0 0.0
    %186 = vmatprep.subr.mxu0 0.0
    %187 = vmatpush1.msra.mxu0 0.0
    %188 = vmatprep.subr.mxu0 0.0
    %189 = vmatpush1.msra.mxu0 0.0
    %190 = vmatprep.subr.mxu0 0.0
    %191 = vmatpush1.msra.mxu0 0.0
    %192 = vmatprep.subr.mxu0 0.0
    %193 = vmatpush1.msra.mxu0 0.0
    %194 = vmatprep.subr.mxu0 0.0
    %195 = vmatpush1.msra.mxu0 0.0
    %196 = vmatprep.subr.mxu0 0.0
    %197 = vmatpush1.msra.mxu0 0.0
    %198 = vmatprep.subr.mxu0 0.0
    %199 = vmatpush1.msra.mxu0 0.0
    %200 = vmatprep.subr.mxu0 0.0
    %201 = vmatpush1.msra.mxu0 0.0
    %202 = vmatprep.subr.mxu0 0.0
    %203 = vmatpush1.msra.mxu0 0.0
    %204 = vmatprep.subr.mxu0 0.0
    %205 = vmatpush1.msra.mxu0 0.0
    %206 = vmatprep.subr.mxu0 0.0
    %207 = vmatpush1.msra.mxu0 0.0
    %208 = vmatprep.subr.mxu0 0.0
    %209 = vmatpush1.msra.mxu0 0.0
    %210 = vmatprep.subr.mxu0 0.0
    %211 = vmatpush1.msra.mxu0 0.0
    %212 = vmatprep.subr.mxu0 0.0
    %213 = vmatpush1.msra.mxu0 0.0
    %214 = vmatprep.subr.mxu0 0.0
    %215 = vmatpush1.msra.mxu0 0.0
    %216 = vmatprep.subr.mxu0 0.0
    %217 = vmatpush1.msra.mxu0 0.0
    %218 = vmatprep.subr.mxu0 0.0
    %219 = vmatpush1.msra.mxu0 0.0
    %220 = vmatprep.subr.mxu0 0.0
    %221 = vmatpush1.msra.mxu0 0.0
    %222 = vmatprep.subr.mxu0 0.0
    %223 = vmatpush1.msra.mxu0 0.0
    %224 = vmatprep.subr.mxu0 0.0
    %225 = vmatpush1.msra.mxu0 0.0
    %226 = vmatprep.mubr.f32.mxu0 0.0
    %227 = vmatmul.mubr.f32.gmra.mrb[0].mxu0 %v84
    %v228 = vpop.f32.mrb[0].mxu0
    %v229 = vadd.f32 %v160, %v228
    %v230 = vpop.f32.mrb[0].mxu0
    %231 = vdwg.mxu0
    %v233 = vlaneseq
    %v234 = vshrl.u32 %v233, 7
    %v235 = vsub.s32 0, %v234
    %v236 = vrot.slane %v71, %v235
    %238 = vmatprep.subr.mxu0 0.0
    %239 = vmatpush1.msra.mxu0 %v63
    %240 = vmatprep.subr.mxu0 0.0
    %241 = vmatpush1.msra.mxu0 %v64
    %242 = vmatprep.subr.mxu0 0.0
    %243 = vmatpush1.msra.mxu0 %v65
    %244 = vmatprep.subr.mxu0 0.0
    %245 = vmatpush1.msra.mxu0 %v66
    %246 = vmatprep.subr.mxu0 0.0
    %247 = vmatpush1.msra.mxu0 0.0
    %248 = vmatprep.subr.mxu0 0.0
    %249 = vmatpush1.msra.mxu0 0.0
    %250 = vmatprep.subr.mxu0 0.0
    %251 = vmatpush1.msra.mxu0 0.0
    %252 = vmatprep.subr.mxu0 0.0
    %253 = vmatpush1.msra.mxu0 0.0
    %254 = vmatprep.subr.mxu0 0.0
    %255 = vmatpush1.msra.mxu0 0.0
    %256 = vmatprep.subr.mxu0 0.0
    %257 = vmatpush1.msra.mxu0 0.0
    %258 = vmatprep.subr.mxu0 0.0
    %259 = vmatpush1.msra.mxu0 0.0
    %260 = vmatprep.subr.mxu0 0.0
    %261 = vmatpush1.msra.mxu0 0.0
    %262 = vmatprep.subr.mxu0 0.0
    %263 = vmatpush1.msra.mxu0 0.0
    %264 = vmatprep.subr.mxu0 0.0
    %265 = vmatpush1.msra.mxu0 0.0
    %266 = vmatprep.subr.mxu0 0.0
    %267 = vmatpush1.msra.mxu0 0.0
    %268 = vmatprep.subr.mxu0 0.0
    %269 = vmatpush1.msra.mxu0 0.0
    %270 = vmatprep.subr.mxu0 0.0
    %271 = vmatpush1.msra.mxu0 0.0
    %272 = vmatprep.subr.mxu0 0.0
    %273 = vmatpush1.msra.mxu0 0.0
    %274 = vmatprep.subr.mxu0 0.0
    %275 = vmatpush1.msra.mxu0 0.0
    %276 = vmatprep.subr.mxu0 0.0
    %277 = vmatpush1.msra.mxu0 0.0
    %278 = vmatprep.subr.mxu0 0.0
    %279 = vmatpush1.msra.mxu0 0.0
    %280 = vmatprep.subr.mxu0 0.0
    %281 = vmatpush1.msra.mxu0 0.0
    %282 = vmatprep.subr.mxu0 0.0
    %283 = vmatpush1.msra.mxu0 0.0
    %284 = vmatprep.subr.mxu0 0.0
    %285 = vmatpush1.msra.mxu0 0.0
    %286 = vmatprep.subr.mxu0 0.0
    %287 = vmatpush1.msra.mxu0 0.0
    %288 = vmatprep.subr.mxu0 0.0
    %289 = vmatpush1.msra.mxu0 0.0
    %290 = vmatprep.subr.mxu0 0.0
    %291 = vmatpush1.msra.mxu0 0.0
    %292 = vmatprep.subr.mxu0 0.0
    %293 = vmatpush1.msra.mxu0 0.0
    %294 = vmatprep.subr.mxu0 0.0
    %295 = vmatpush1.msra.mxu0 0.0
    %296 = vmatprep.subr.mxu0 0.0
    %297 = vmatpush1.msra.mxu0 0.0
    %298 = vmatprep.subr.mxu0 0.0
    %299 = vmatpush1.msra.mxu0 0.0
    %300 = vmatprep.subr.mxu0 0.0
    %301 = vmatpush1.msra.mxu0 0.0
    %302 = vmatprep.mubr.f32.mxu0 0.0
    %303 = vmatmul.mubr.f32.gmra.mrb[0].mxu0 %v84
    %v304 = vpop.f32.mrb[0].mxu0
    %v305 = vadd.f32 %v236, %v304
    %v306 = vpop.f32.mrb[0].mxu0
    %307 = vdwg.mxu0
    %v308 = vadd.f32 %v73, %v153
    %v309 = vxor.u32 %v308, 2147483648
    %v310 = vmul.f32 %v309, 1.442695
    %v311 = vpow.pop %v310
    %v312 = vadd.f32 %v311, 1.0
    %v313 = vrcp.pop %v312
    %v314 = vmul.f32 1.0, %v313
    %v315 = vadd.f32 %v74, %v229
    %v316 = vxor.u32 %v315, 2147483648
    %v317 = vmul.f32 %v316, 1.442695
    %v318 = vpow.pop %v317
    %v319 = vadd.f32 %v318, 1.0
    %v320 = vrcp.pop %v319
    %v321 = vmul.f32 1.0, %v320
    %v322 = vmul.f32 %v314, %v305
    %v323 = vadd.f32 %v75, %v322
    %v324 = vtanh.pop %v323
    %v325 = vsub.f32 1.0, %v321
    %v326 = vmul.f32 %v325, %v324
    %v327 = vmul.f32 %v321, %v72
    %v328 = vadd.f32 %v326, %v327
    %vm329 = vcmask 254976
    %330 = vst.msk [vmem:[#allocation8] sm:$0x3] %vm329, %v328
    %s331 = scalar_lea.vmem [#allocation3], 6
    %v332 = vld [vmem:[%s331] sm:$0x3]
    %v333 = vld [vmem:[%s331 + $0x2] sm:$0x3]
    %v334 = vld [vmem:[%s331 + $0x4] sm:$0x3]
    %v336 = vsel %vm82, %v328, 0
    %338 = vmatprep.subr.mxu0 0.0
    %339 = vmatpush1.msra.mxu0 %v53
    %340 = vmatprep.subr.mxu0 0.0
    %341 = vmatpush1.msra.mxu0 %v54
    %342 = vmatprep.subr.mxu0 0.0
    %343 = vmatpush1.msra.mxu0 %v55
    %344 = vmatprep.subr.mxu0 0.0
    %345 = vmatpush1.msra.mxu0 %v56
    %346 = vmatprep.subr.mxu0 0.0
    %347 = vmatpush1.msra.mxu0 0.0
    %348 = vmatprep.subr.mxu0 0.0
    %349 = vmatpush1.msra.mxu0 0.0
    %350 = vmatprep.subr.mxu0 0.0
    %351 = vmatpush1.msra.mxu0 0.0
    %352 = vmatprep.subr.mxu0 0.0
    %353 = vmatpush1.msra.mxu0 0.0
    %354 = vmatprep.subr.mxu0 0.0
    %355 = vmatpush1.msra.mxu0 0.0
    %356 = vmatprep.subr.mxu0 0.0
    %357 = vmatpush1.msra.mxu0 0.0
    %358 = vmatprep.subr.mxu0 0.0
    %359 = vmatpush1.msra.mxu0 0.0
    %360 = vmatprep.subr.mxu0 0.0
    %361 = vmatpush1.msra.mxu0 0.0
    %362 = vmatprep.subr.mxu0 0.0
    %363 = vmatpush1.msra.mxu0 0.0
    %364 = vmatprep.subr.mxu0 0.0
    %365 = vmatpush1.msra.mxu0 0.0
    %366 = vmatprep.subr.mxu0 0.0
    %367 = vmatpush1.msra.mxu0 0.0
    %368 = vmatprep.subr.mxu0 0.0
    %369 = vmatpush1.msra.mxu0 0.0
    %370 = vmatprep.subr.mxu0 0.0
    %371 = vmatpush1.msra.mxu0 0.0
    %372 = vmatprep.subr.mxu0 0.0
    %373 = vmatpush1.msra.mxu0 0.0
    %374 = vmatprep.subr.mxu0 0.0
    %375 = vmatpush1.msra.mxu0 0.0
    %376 = vmatprep.subr.mxu0 0.0
    %377 = vmatpush1.msra.mxu0 0.0
    %378 = vmatprep.subr.mxu0 0.0
    %379 = vmatpush1.msra.mxu0 0.0
    %380 = vmatprep.subr.mxu0 0.0
    %381 = vmatpush1.msra.mxu0 0.0
    %382 = vmatprep.subr.mxu0 0.0
    %383 = vmatpush1.msra.mxu0 0.0
    %384 = vmatprep.subr.mxu0 0.0
    %385 = vmatpush1.msra.mxu0 0.0
    %386 = vmatprep.subr.mxu0 0.0
    %387 = vmatpush1.msra.mxu0 0.0
    %388 = vmatprep.subr.mxu0 0.0
    %389 = vmatpush1.msra.mxu0 0.0
    %390 = vmatprep.subr.mxu0 0.0
    %391 = vmatpush1.msra.mxu0 0.0
    %392 = vmatprep.subr.mxu0 0.0
    %393 = vmatpush1.msra.mxu0 0.0
    %394 = vmatprep.subr.mxu0 0.0
    %395 = vmatpush1.msra.mxu0 0.0
    %396 = vmatprep.subr.mxu0 0.0
    %397 = vmatpush1.msra.mxu0 0.0
    %398 = vmatprep.subr.mxu0 0.0
    %399 = vmatpush1.msra.mxu0 0.0
    %400 = vmatprep.subr.mxu0 0.0
    %401 = vmatpush1.msra.mxu0 0.0
    %402 = vmatprep.mubr.f32.mxu0 0.0
    %403 = vmatmul.mubr.f32.gmra.mrb[0].mxu0 %v336
    %v404 = vpop.f32.mrb[0].mxu0
    %v405 = vadd.f32 %v80, %v404
    %v406 = vpop.f32.mrb[0].mxu0
    %407 = vdwg.mxu0
    %408 = vmatprep.subr.mxu0 0.0
    %409 = vmatpush1.msra.mxu0 %v58
    %410 = vmatprep.subr.mxu0 0.0
    %411 = vmatpush1.msra.mxu0 %v59
    %412 = vmatprep.subr.mxu0 0.0
    %413 = vmatpush1.msra.mxu0 %v60
    %414 = vmatprep.subr.mxu0 0.0
    %415 = vmatpush1.msra.mxu0 %v61
    %416 = vmatprep.subr.mxu0 0.0
    %417 = vmatpush1.msra.mxu0 0.0
    %418 = vmatprep.subr.mxu0 0.0
    %419 = vmatpush1.msra.mxu0 0.0
    %420 = vmatprep.subr.mxu0 0.0
    %421 = vmatpush1.msra.mxu0 0.0
    %422 = vmatprep.subr.mxu0 0.0
    %423 = vmatpush1.msra.mxu0 0.0
    %424 = vmatprep.subr.mxu0 0.0
    %425 = vmatpush1.msra.mxu0 0.0
    %426 = vmatprep.subr.mxu0 0.0
    %427 = vmatpush1.msra.mxu0 0.0
    %428 = vmatprep.subr.mxu0 0.0
    %429 = vmatpush1.msra.mxu0 0.0
    %430 = vmatprep.subr.mxu0 0.0
    %431 = vmatpush1.msra.mxu0 0.0
    %432 = vmatprep.subr.mxu0 0.0
    %433 = vmatpush1.msra.mxu0 0.0
    %434 = vmatprep.subr.mxu0 0.0
    %435 = vmatpush1.msra.mxu0 0.0
    %436 = vmatprep.subr.mxu0 0.0
    %437 = vmatpush1.msra.mxu0 0.0
    %438 = vmatprep.subr.mxu0 0.0
    %439 = vmatpush1.msra.mxu0 0.0
    %440 = vmatprep.subr.mxu0 0.0
    %441 = vmatpush1.msra.mxu0 0.0
    %442 = vmatprep.subr.mxu0 0.0
    %443 = vmatpush1.msra.mxu0 0.0
    %444 = vmatprep.subr.mxu0 0.0
    %445 = vmatpush1.msra.mxu0 0.0
    %446 = vmatprep.subr.mxu0 0.0
    %447 = vmatpush1.msra.mxu0 0.0
    %448 = vmatprep.subr.mxu0 0.0
    %449 = vmatpush1.msra.mxu0 0.0
    %450 = vmatprep.subr.mxu0 0.0
    %451 = vmatpush1.msra.mxu0 0.0
    %452 = vmatprep.subr.mxu0 0.0
    %453 = vmatpush1.msra.mxu0 0.0
    %454 = vmatprep.subr.mxu0 0.0
    %455 = vmatpush1.msra.mxu0 0.0
    %456 = vmatprep.subr.mxu0 0.0
    %457 = vmatpush1.msra.mxu0 0.0
    %458 = vmatprep.subr.mxu0 0.0
    %459 = vmatpush1.msra.mxu0 0.0
    %460 = vmatprep.subr.mxu0 0.0
    %461 = vmatpush1.msra.mxu0 0.0
    %462 = vmatprep.subr.mxu0 0.0
    %463 = vmatpush1.msra.mxu0 0.0
    %464 = vmatprep.subr.mxu0 0.0
    %465 = vmatpush1.msra.mxu0 0.0
    %466 = vmatprep.subr.mxu0 0.0
    %467 = vmatpush1.msra.mxu0 0.0
    %468 = vmatprep.subr.mxu0 0.0
    %469 = vmatpush1.msra.mxu0 0.0
    %470 = vmatprep.subr.mxu0 0.0
    %471 = vmatpush1.msra.mxu0 0.0
    %472 = vmatprep.mubr.f32.mxu0 0.0
    %473 = vmatmul.mubr.f32.gmra.mrb[0].mxu0 %v336
    %v474 = vpop.f32.mrb[0].mxu0
    %v475 = vadd.f32 %v160, %v474
    %v476 = vpop.f32.mrb[0].mxu0
    %477 = vdwg.mxu0
    %478 = vmatprep.subr.mxu0 0.0
    %479 = vmatpush1.msra.mxu0 %v63
    %480 = vmatprep.subr.mxu0 0.0
    %481 = vmatpush1.msra.mxu0 %v64
    %482 = vmatprep.subr.mxu0 0.0
    %483 = vmatpush1.msra.mxu0 %v65
    %484 = vmatprep.subr.mxu0 0.0
    %485 = vmatpush1.msra.mxu0 %v66
    %486 = vmatprep.subr.mxu0 0.0
    %487 = vmatpush1.msra.mxu0 0.0
    %488 = vmatprep.subr.mxu0 0.0
    %489 = vmatpush1.msra.mxu0 0.0
    %490 = vmatprep.subr.mxu0 0.0
    %491 = vmatpush1.msra.mxu0 0.0
    %492 = vmatprep.subr.mxu0 0.0
    %493 = vmatpush1.msra.mxu0 0.0
    %494 = vmatprep.subr.mxu0 0.0
    %495 = vmatpush1.msra.mxu0 0.0
    %496 = vmatprep.subr.mxu0 0.0
    %497 = vmatpush1.msra.mxu0 0.0
    %498 = vmatprep.subr.mxu0 0.0
    %499 = vmatpush1.msra.mxu0 0.0
    %500 = vmatprep.subr.mxu0 0.0
    %501 = vmatpush1.msra.mxu0 0.0
    %502 = vmatprep.subr.mxu0 0.0
    %503 = vmatpush1.msra.mxu0 0.0
    %504 = vmatprep.subr.mxu0 0.0
    %505 = vmatpush1.msra.mxu0 0.0
    %506 = vmatprep.subr.mxu0 0.0
    %507 = vmatpush1.msra.mxu0 0.0
    %508 = vmatprep.subr.mxu0 0.0
    %509 = vmatpush1.msra.mxu0 0.0
    %510 = vmatprep.subr.mxu0 0.0
    %511 = vmatpush1.msra.mxu0 0.0
    %512 = vmatprep.subr.mxu0 0.0
    %513 = vmatpush1.msra.mxu0 0.0
    %514 = vmatprep.subr.mxu0 0.0
    %515 = vmatpush1.msra.mxu0 0.0
    %516 = vmatprep.subr.mxu0 0.0
    %517 = vmatpush1.msra.mxu0 0.0
    %518 = vmatprep.subr.mxu0 0.0
    %519 = vmatpush1.msra.mxu0 0.0
    %520 = vmatprep.subr.mxu0 0.0
    %521 = vmatpush1.msra.mxu0 0.0
    %522 = vmatprep.subr.mxu0 0.0
    %523 = vmatpush1.msra.mxu0 0.0
    %524 = vmatprep.subr.mxu0 0.0
    %525 = vmatpush1.msra.mxu0 0.0
    %526 = vmatprep.subr.mxu0 0.0
    %527 = vmatpush1.msra.mxu0 0.0
    %528 = vmatprep.subr.mxu0 0.0
    %529 = vmatpush1.msra.mxu0 0.0
    %530 = vmatprep.subr.mxu0 0.0
    %531 = vmatpush1.msra.mxu0 0.0
    %532 = vmatprep.subr.mxu0 0.0
    %533 = vmatpush1.msra.mxu0 0.0
    %534 = vmatprep.subr.mxu0 0.0
    %535 = vmatpush1.msra.mxu0 0.0
    %536 = vmatprep.subr.mxu0 0.0
    %537 = vmatpush1.msra.mxu0 0.0
    %538 = vmatprep.subr.mxu0 0.0
    %539 = vmatpush1.msra.mxu0 0.0
    %540 = vmatprep.subr.mxu0 0.0
    %541 = vmatpush1.msra.mxu0 0.0
    %542 = vmatprep.mubr.f32.mxu0 0.0
    %543 = vmatmul.mubr.f32.gmra.mrb[0].mxu0 %v336
    %v544 = vpop.f32.mrb[0].mxu0
    %v545 = vadd.f32 %v236, %v544
    %v546 = vpop.f32.mrb[0].mxu0
    %547 = vdwg.mxu0
    %v548 = vadd.f32 %v332, %v405
    %v549 = vxor.u32 %v548, 2147483648
    %v550 = vmul.f32 %v549, 1.442695
    %v551 = vpow.pop %v550
    %v552 = vadd.f32 %v551, 1.0
    %v553 = vrcp.pop %v552
    %v554 = vmul.f32 1.0, %v553
    %v555 = vadd.f32 %v333, %v475
    %v556 = vxor.u32 %v555, 2147483648
    %v557 = vmul.f32 %v556, 1.442695
    %v558 = vpow.pop %v557
    %v559 = vadd.f32 %v558, 1.0
    %v560 = vrcp.pop %v559
    %v561 = vmul.f32 1.0, %v560
    %v562 = vmul.f32 %v554, %v545
    %v563 = vadd.f32 %v334, %v562
    %v564 = vtanh.pop %v563
    %v565 = vsub.f32 1.0, %v561
    %v566 = vmul.f32 %v565, %v564
    %v567 = vmul.f32 %v561, %v328
    %v568 = vadd.f32 %v566, %v567
    %s569 = scalar_lea.vmem [#allocation8], 2
    %570 = vst.msk [vmem:[%s569] sm:$0x3] %vm329, %v568
    %s571 = scalar_lea.vmem [#allocation3], 12
    %v572 = vld [vmem:[%s571] sm:$0x3]
    %v573 = vld [vmem:[%s571 + $0x2] sm:$0x3]
    %v574 = vld [vmem:[%s571 + $0x4] sm:$0x3]
    %v576 = vsel %vm82, %v568, 0
    %578 = vmatprep.subr.mxu0 0.0
    %579 = vmatpush1.msra.mxu0 %v53
    %580 = vmatprep.subr.mxu0 0.0
    %581 = vmatpush1.msra.mxu0 %v54
    %582 = vmatprep.subr.mxu0 0.0
    %583 = vmatpush1.msra.mxu0 %v55
    %584 = vmatprep.subr.mxu0 0.0
    %585 = vmatpush1.msra.mxu0 %v56
    %586 = vmatprep.subr.mxu0 0.0
    %587 = vmatpush1.msra.mxu0 0.0
    %588 = vmatprep.subr.mxu0 0.0
    %589 = vmatpush1.msra.mxu0 0.0
    %590 = vmatprep.subr.mxu0 0.0
    %591 = vmatpush1.msra.mxu0 0.0
    %592 = vmatprep.subr.mxu0 0.0
    %593 = vmatpush1.msra.mxu0 0.0
    %594 = vmatprep.subr.mxu0 0.0
    %595 = vmatpush1.msra.mxu0 0.0
    %596 = vmatprep.subr.mxu0 0.0
    %597 = vmatpush1.msra.mxu0 0.0
    %598 = vmatprep.subr.mxu0 0.0
    %599 = vmatpush1.msra.mxu0 0.0
    %600 = vmatprep.subr.mxu0 0.0
    %601 = vmatpush1.msra.mxu0 0.0
    %602 = vmatprep.subr.mxu0 0.0
    %603 = vmatpush1.msra.mxu0 0.0
    %604 = vmatprep.subr.mxu0 0.0
    %605 = vmatpush1.msra.mxu0 0.0
    %606 = vmatprep.subr.mxu0 0.0
    %607 = vmatpush1.msra.mxu0 0.0
    %608 = vmatprep.subr.mxu0 0.0
    %609 = vmatpush1.msra.mxu0 0.0
    %610 = vmatprep.subr.mxu0 0.0
    %611 = vmatpush1.msra.mxu0 0.0
    %612 = vmatprep.subr.mxu0 0.0
    %613 = vmatpush1.msra.mxu0 0.0
    %614 = vmatprep.subr.mxu0 0.0
    %615 = vmatpush1.msra.mxu0 0.0
    %616 = vmatprep.subr.mxu0 0.0
    %617 = vmatpush1.msra.mxu0 0.0
    %618 = vmatprep.subr.mxu0 0.0
    %619 = vmatpush1.msra.mxu0 0.0
    %620 = vmatprep.subr.mxu0 0.0
    %621 = vmatpush1.msra.mxu0 0.0
    %622 = vmatprep.subr.mxu0 0.0
    %623 = vmatpush1.msra.mxu0 0.0
    %624 = vmatprep.subr.mxu0 0.0
    %625 = vmatpush1.msra.mxu0 0.0
    %626 = vmatprep.subr.mxu0 0.0
    %627 = vmatpush1.msra.mxu0 0.0
    %628 = vmatprep.subr.mxu0 0.0
    %629 = vmatpush1.msra.mxu0 0.0
    %630 = vmatprep.subr.mxu0 0.0
    %631 = vmatpush1.msra.mxu0 0.0
    %632 = vmatprep.subr.mxu0 0.0
    %633 = vmatpush1.msra.mxu0 0.0
    %634 = vmatprep.subr.mxu0 0.0
    %635 = vmatpush1.msra.mxu0 0.0
    %636 = vmatprep.subr.mxu0 0.0
    %637 = vmatpush1.msra.mxu0 0.0
    %638 = vmatprep.subr.mxu0 0.0
    %639 = vmatpush1.msra.mxu0 0.0
    %640 = vmatprep.subr.mxu0 0.0
    %641 = vmatpush1.msra.mxu0 0.0
    %642 = vmatprep.mubr.f32.mxu0 0.0
    %643 = vmatmul.mubr.f32.gmra.mrb[0].mxu0 %v576
    %v644 = vpop.f32.mrb[0].mxu0
    %v645 = vadd.f32 %v80, %v644
    %v646 = vpop.f32.mrb[0].mxu0
    %647 = vdwg.mxu0
    %648 = vmatprep.subr.mxu0 0.0
    %649 = vmatpush1.msra.mxu0 %v58
    %650 = vmatprep.subr.mxu0 0.0
    %651 = vmatpush1.msra.mxu0 %v59
    %652 = vmatprep.subr.mxu0 0.0
    %653 = vmatpush1.msra.mxu0 %v60
    %654 = vmatprep.subr.mxu0 0.0
    %655 = vmatpush1.msra.mxu0 %v61
    %656 = vmatprep.subr.mxu0 0.0
    %657 = vmatpush1.msra.mxu0 0.0
    %658 = vmatprep.subr.mxu0 0.0
    %659 = vmatpush1.msra.mxu0 0.0
    %660 = vmatprep.subr.mxu0 0.0
    %661 = vmatpush1.msra.mxu0 0.0
    %662 = vmatprep.subr.mxu0 0.0
    %663 = vmatpush1.msra.mxu0 0.0
    %664 = vmatprep.subr.mxu0 0.0
    %665 = vmatpush1.msra.mxu0 0.0
    %666 = vmatprep.subr.mxu0 0.0
    %667 = vmatpush1.msra.mxu0 0.0
    %668 = vmatprep.subr.mxu0 0.0
    %669 = vmatpush1.msra.mxu0 0.0
    %670 = vmatprep.subr.mxu0 0.0
    %671 = vmatpush1.msra.mxu0 0.0
    %672 = vmatprep.subr.mxu0 0.0
    %673 = vmatpush1.msra.mxu0 0.0
    %674 = vmatprep.subr.mxu0 0.0
    %675 = vmatpush1.msra.mxu0 0.0
    %676 = vmatprep.subr.mxu0 0.0
    %677 = vmatpush1.msra.mxu0 0.0
    %678 = vmatprep.subr.mxu0 0.0
    %679 = vmatpush1.msra.mxu0 0.0
    %680 = vmatprep.subr.mxu0 0.0
    %681 = vmatpush1.msra.mxu0 0.0
    %682 = vmatprep.subr.mxu0 0.0
    %683 = vmatpush1.msra.mxu0 0.0
    %684 = vmatprep.subr.mxu0 0.0
    %685 = vmatpush1.msra.mxu0 0.0
    %686 = vmatprep.subr.mxu0 0.0
    %687 = vmatpush1.msra.mxu0 0.0
    %688 = vmatprep.subr.mxu0 0.0
    %689 = vmatpush1.msra.mxu0 0.0
    %690 = vmatprep.subr.mxu0 0.0
    %691 = vmatpush1.msra.mxu0 0.0
    %692 = vmatprep.subr.mxu0 0.0
    %693 = vmatpush1.msra.mxu0 0.0
    %694 = vmatprep.subr.mxu0 0.0
    %695 = vmatpush1.msra.mxu0 0.0
    %696 = vmatprep.subr.mxu0 0.0
    %697 = vmatpush1.msra.mxu0 0.0
    %698 = vmatprep.subr.mxu0 0.0
    %699 = vmatpush1.msra.mxu0 0.0
    %700 = vmatprep.subr.mxu0 0.0
    %701 = vmatpush1.msra.mxu0 0.0
    %702 = vmatprep.subr.mxu0 0.0
    %703 = vmatpush1.msra.mxu0 0.0
    %704 = vmatprep.subr.mxu0 0.0
    %705 = vmatpush1.msra.mxu0 0.0
    %706 = vmatprep.subr.mxu0 0.0
    %707 = vmatpush1.msra.mxu0 0.0
    %708 = vmatprep.subr.mxu0 0.0
    %709 = vmatpush1.msra.mxu0 0.0
    %710 = vmatprep.subr.mxu0 0.0
    %711 = vmatpush1.msra.mxu0 0.0
    %712 = vmatprep.mubr.f32.mxu0 0.0
    %713 = vmatmul.mubr.f32.gmra.mrb[0].mxu0 %v576
    %v714 = vpop.f32.mrb[0].mxu0
    %v715 = vadd.f32 %v160, %v714
    %v716 = vpop.f32.mrb[0].mxu0
    %717 = vdwg.mxu0
    %718 = vmatprep.subr.mxu0 0.0
    %719 = vmatpush1.msra.mxu0 %v63
    %720 = vmatprep.subr.mxu0 0.0
    %721 = vmatpush1.msra.mxu0 %v64
    %722 = vmatprep.subr.mxu0 0.0
    %723 = vmatpush1.msra.mxu0 %v65
    %724 = vmatprep.subr.mxu0 0.0
    %725 = vmatpush1.msra.mxu0 %v66
    %726 = vmatprep.subr.mxu0 0.0
    %727 = vmatpush1.msra.mxu0 0.0
    %728 = vmatprep.subr.mxu0 0.0
    %729 = vmatpush1.msra.mxu0 0.0
    %730 = vmatprep.subr.mxu0 0.0
    %731 = vmatpush1.msra.mxu0 0.0
    %732 = vmatprep.subr.mxu0 0.0
    %733 = vmatpush1.msra.mxu0 0.0
    %734 = vmatprep.subr.mxu0 0.0
    %735 = vmatpush1.msra.mxu0 0.0
    %736 = vmatprep.subr.mxu0 0.0
    %737 = vmatpush1.msra.mxu0 0.0
    %738 = vmatprep.subr.mxu0 0.0
    %739 = vmatpush1.msra.mxu0 0.0
    %740 = vmatprep.subr.mxu0 0.0
    %741 = vmatpush1.msra.mxu0 0.0
    %742 = vmatprep.subr.mxu0 0.0
    %743 = vmatpush1.msra.mxu0 0.0
    %744 = vmatprep.subr.mxu0 0.0
    %745 = vmatpush1.msra.mxu0 0.0
    %746 = vmatprep.subr.mxu0 0.0
    %747 = vmatpush1.msra.mxu0 0.0
    %748 = vmatprep.subr.mxu0 0.0
    %749 = vmatpush1.msra.mxu0 0.0
    %750 = vmatprep.subr.mxu0 0.0
    %751 = vmatpush1.msra.mxu0 0.0
    %752 = vmatprep.subr.mxu0 0.0
    %753 = vmatpush1.msra.mxu0 0.0
    %754 = vmatprep.subr.mxu0 0.0
    %755 = vmatpush1.msra.mxu0 0.0
    %756 = vmatprep.subr.mxu0 0.0
    %757 = vmatpush1.msra.mxu0 0.0
    %758 = vmatprep.subr.mxu0 0.0
    %759 = vmatpush1.msra.mxu0 0.0
    %760 = vmatprep.subr.mxu0 0.0
    %761 = vmatpush1.msra.mxu0 0.0
    %762 = vmatprep.subr.mxu0 0.0
    %763 = vmatpush1.msra.mxu0 0.0
    %764 = vmatprep.subr.mxu0 0.0
    %765 = vmatpush1.msra.mxu0 0.0
    %766 = vmatprep.subr.mxu0 0.0
    %767 = vmatpush1.msra.mxu0 0.0
    %768 = vmatprep.subr.mxu0 0.0
    %769 = vmatpush1.msra.mxu0 0.0
    %770 = vmatprep.subr.mxu0 0.0
    %771 = vmatpush1.msra.mxu0 0.0
    %772 = vmatprep.subr.mxu0 0.0
    %773 = vmatpush1.msra.mxu0 0.0
    %774 = vmatprep.subr.mxu0 0.0
    %775 = vmatpush1.msra.mxu0 0.0
    %776 = vmatprep.subr.mxu0 0.0
    %777 = vmatpush1.msra.mxu0 0.0
    %778 = vmatprep.subr.mxu0 0.0
    %779 = vmatpush1.msra.mxu0 0.0
    %780 = vmatprep.subr.mxu0 0.0
    %781 = vmatpush1.msra.mxu0 0.0
    %782 = vmatprep.mubr.f32.mxu0 0.0
    %783 = vmatmul.mubr.f32.gmra.mrb[0].mxu0 %v576
    %v784 = vpop.f32.mrb[0].mxu0
    %v785 = vadd.f32 %v236, %v784
    %v786 = vpop.f32.mrb[0].mxu0
    %787 = vdwg.mxu0
    %v788 = vadd.f32 %v572, %v645
    %v789 = vxor.u32 %v788, 2147483648
    %v790 = vmul.f32 %v789, 1.442695
    %v791 = vpow.pop %v790
    %v792 = vadd.f32 %v791, 1.0
    %v793 = vrcp.pop %v792
    %v794 = vmul.f32 1.0, %v793
    %v795 = vadd.f32 %v573, %v715
    %v796 = vxor.u32 %v795, 2147483648
    %v797 = vmul.f32 %v796, 1.442695
    %v798 = vpow.pop %v797
    %v799 = vadd.f32 %v798, 1.0
    %v800 = vrcp.pop %v799
    %v801 = vmul.f32 1.0, %v800
    %v802 = vmul.f32 %v794, %v785
    %v803 = vadd.f32 %v574, %v802
    %v804 = vtanh.pop %v803
    %v805 = vsub.f32 1.0, %v801
    %v806 = vmul.f32 %v805, %v804
    %v807 = vmul.f32 %v801, %v568
    %v808 = vadd.f32 %v806, %v807
    %s809 = scalar_lea.vmem [#allocation8], 4
    %810 = vst.msk [vmem:[%s809] sm:$0x3] %vm329, %v808
    %s811 = scalar_lea.vmem [#allocation3], 18
    %v812 = vld [vmem:[%s811] sm:$0x3]
    %v813 = vld [vmem:[%s811 + $0x2] sm:$0x3]
    %v814 = vld [vmem:[%s811 + $0x4] sm:$0x3]
    %v816 = vsel %vm82, %v808, 0
    %818 = vmatprep.subr.mxu0 0.0
    %819 = vmatpush1.msra.mxu0 %v53
    %820 = vmatprep.subr.mxu0 0.0
    %821 = vmatpush1.msra.mxu0 %v54
    %822 = vmatprep.subr.mxu0 0.0
    %823 = vmatpush1.msra.mxu0 %v55
    %824 = vmatprep.subr.mxu0 0.0
    %825 = vmatpush1.msra.mxu0 %v56
    %826 = vmatprep.subr.mxu0 0.0
    %827 = vmatpush1.msra.mxu0 0.0
    %828 = vmatprep.subr.mxu0 0.0
    %829 = vmatpush1.msra.mxu0 0.0
    %830 = vmatprep.subr.mxu0 0.0
    %831 = vmatpush1.msra.mxu0 0.0
    %832 = vmatprep.subr.mxu0 0.0
    %833 = vmatpush1.msra.mxu0 0.0
    %834 = vmatprep.subr.mxu0 0.0
    %835 = vmatpush1.msra.mxu0 0.0
    %836 = vmatprep.subr.mxu0 0.0
    %837 = vmatpush1.msra.mxu0 0.0
    %838 = vmatprep.subr.mxu0 0.0
    %839 = vmatpush1.msra.mxu0 0.0
    %840 = vmatprep.subr.mxu0 0.0
    %841 = vmatpush1.msra.mxu0 0.0
    %842 = vmatprep.subr.mxu0 0.0
    %843 = vmatpush1.msra.mxu0 0.0
    %844 = vmatprep.subr.mxu0 0.0
    %845 = vmatpush1.msra.mxu0 0.0
    %846 = vmatprep.subr.mxu0 0.0
    %847 = vmatpush1.msra.mxu0 0.0
    %848 = vmatprep.subr.mxu0 0.0
    %849 = vmatpush1.msra.mxu0 0.0
    %850 = vmatprep.subr.mxu0 0.0
    %851 = vmatpush1.msra.mxu0 0.0
    %852 = vmatprep.subr.mxu0 0.0
    %853 = vmatpush1.msra.mxu0 0.0
    %854 = vmatprep.subr.mxu0 0.0
    %855 = vmatpush1.msra.mxu0 0.0
    %856 = vmatprep.subr.mxu0 0.0
    %857 = vmatpush1.msra.mxu0 0.0
    %858 = vmatprep.subr.mxu0 0.0
    %859 = vmatpush1.msra.mxu0 0.0
    %860 = vmatprep.subr.mxu0 0.0
    %861 = vmatpush1.msra.mxu0 0.0
    %862 = vmatprep.subr.mxu0 0.0
    %863 = vmatpush1.msra.mxu0 0.0
    %864 = vmatprep.subr.mxu0 0.0
    %865 = vmatpush1.msra.mxu0 0.0
    %866 = vmatprep.subr.mxu0 0.0
    %867 = vmatpush1.msra.mxu0 0.0
    %868 = vmatprep.subr.mxu0 0.0
    %869 = vmatpush1.msra.mxu0 0.0
    %870 = vmatprep.subr.mxu0 0.0
    %871 = vmatpush1.msra.mxu0 0.0
    %872 = vmatprep.subr.mxu0 0.0
    %873 = vmatpush1.msra.mxu0 0.0
    %874 = vmatprep.subr.mxu0 0.0
    %875 = vmatpush1.msra.mxu0 0.0
    %876 = vmatprep.subr.mxu0 0.0
    %877 = vmatpush1.msra.mxu0 0.0
    %878 = vmatprep.subr.mxu0 0.0
    %879 = vmatpush1.msra.mxu0 0.0
    %880 = vmatprep.subr.mxu0 0.0
    %881 = vmatpush1.msra.mxu0 0.0
    %882 = vmatprep.mubr.f32.mxu0 0.0
    %883 = vmatmul.mubr.f32.gmra.mrb[0].mxu0 %v816
    %v884 = vpop.f32.mrb[0].mxu0
    %v885 = vadd.f32 %v80, %v884
    %v886 = vpop.f32.mrb[0].mxu0
    %887 = vdwg.mxu0
    %888 = vmatprep.subr.mxu0 0.0
    %889 = vmatpush1.msra.mxu0 %v58
    %890 = vmatprep.subr.mxu0 0.0
    %891 = vmatpush1.msra.mxu0 %v59
    %892 = vmatprep.subr.mxu0 0.0
    %893 = vmatpush1.msra.mxu0 %v60
    %894 = vmatprep.subr.mxu0 0.0
    %895 = vmatpush1.msra.mxu0 %v61
    %896 = vmatprep.subr.mxu0 0.0
    %897 = vmatpush1.msra.mxu0 0.0
    %898 = vmatprep.subr.mxu0 0.0
    %899 = vmatpush1.msra.mxu0 0.0
    %900 = vmatprep.subr.mxu0 0.0
    %901 = vmatpush1.msra.mxu0 0.0
    %902 = vmatprep.subr.mxu0 0.0
    %903 = vmatpush1.msra.mxu0 0.0
    %904 = vmatprep.subr.mxu0 0.0
    %905 = vmatpush1.msra.mxu0 0.0
    %906 = vmatprep.subr.mxu0 0.0
    %907 = vmatpush1.msra.mxu0 0.0
    %908 = vmatprep.subr.mxu0 0.0
    %909 = vmatpush1.msra.mxu0 0.0
    %910 = vmatprep.subr.mxu0 0.0
    %911 = vmatpush1.msra.mxu0 0.0
    %912 = vmatprep.subr.mxu0 0.0
    %913 = vmatpush1.msra.mxu0 0.0
    %914 = vmatprep.subr.mxu0 0.0
    %915 = vmatpush1.msra.mxu0 0.0
    %916 = vmatprep.subr.mxu0 0.0
    %917 = vmatpush1.msra.mxu0 0.0
    %918 = vmatprep.subr.mxu0 0.0
    %919 = vmatpush1.msra.mxu0 0.0
    %920 = vmatprep.subr.mxu0 0.0
    %921 = vmatpush1.msra.mxu0 0.0
    %922 = vmatprep.subr.mxu0 0.0
    %923 = vmatpush1.msra.mxu0 0.0
    %924 = vmatprep.subr.mxu0 0.0
    %925 = vmatpush1.msra.mxu0 0.0
    %926 = vmatprep.subr.mxu0 0.0
    %927 = vmatpush1.msra.mxu0 0.0
    %928 = vmatprep.subr.mxu0 0.0
    %929 = vmatpush1.msra.mxu0 0.0
    %930 = vmatprep.subr.mxu0 0.0
    %931 = vmatpush1.msra.mxu0 0.0
    %932 = vmatprep.subr.mxu0 0.0
    %933 = vmatpush1.msra.mxu0 0.0
    %934 = vmatprep.subr.mxu0 0.0
    %935 = vmatpush1.msra.mxu0 0.0
    %936 = vmatprep.subr.mxu0 0.0
    %937 = vmatpush1.msra.mxu0 0.0
    %938 = vmatprep.subr.mxu0 0.0
    %939 = vmatpush1.msra.mxu0 0.0
    %940 = vmatprep.subr.mxu0 0.0
    %941 = vmatpush1.msra.mxu0 0.0
    %942 = vmatprep.subr.mxu0 0.0
    %943 = vmatpush1.msra.mxu0 0.0
    %944 = vmatprep.subr.mxu0 0.0
    %945 = vmatpush1.msra.mxu0 0.0
    %946 = vmatprep.subr.mxu0 0.0
    %947 = vmatpush1.msra.mxu0 0.0
    %948 = vmatprep.subr.mxu0 0.0
    %949 = vmatpush1.msra.mxu0 0.0
    %950 = vmatprep.subr.mxu0 0.0
    %951 = vmatpush1.msra.mxu0 0.0
    %952 = vmatprep.mubr.f32.mxu0 0.0
    %953 = vmatmul.mubr.f32.gmra.mrb[0].mxu0 %v816
    %v954 = vpop.f32.mrb[0].mxu0
    %v955 = vadd.f32 %v160, %v954
    %v956 = vpop.f32.mrb[0].mxu0
    %957 = vdwg.mxu0
    %958 = vmatprep.subr.mxu0 0.0
    %959 = vmatpush1.msra.mxu0 %v63
    %960 = vmatprep.subr.mxu0 0.0
    %961 = vmatpush1.msra.mxu0 %v64
    %962 = vmatprep.subr.mxu0 0.0
    %963 = vmatpush1.msra.mxu0 %v65
    %964 = vmatprep.subr.mxu0 0.0
    %965 = vmatpush1.msra.mxu0 %v66
    %966 = vmatprep.subr.mxu0 0.0
    %967 = vmatpush1.msra.mxu0 0.0
    %968 = vmatprep.subr.mxu0 0.0
    %969 = vmatpush1.msra.mxu0 0.0
    %970 = vmatprep.subr.mxu0 0.0
    %971 = vmatpush1.msra.mxu0 0.0
    %972 = vmatprep.subr.mxu0 0.0
    %973 = vmatpush1.msra.mxu0 0.0
    %974 = vmatprep.subr.mxu0 0.0
    %975 = vmatpush1.msra.mxu0 0.0
    %976 = vmatprep.subr.mxu0 0.0
    %977 = vmatpush1.msra.mxu0 0.0
    %978 = vmatprep.subr.mxu0 0.0
    %979 = vmatpush1.msra.mxu0 0.0
    %980 = vmatprep.subr.mxu0 0.0
    %981 = vmatpush1.msra.mxu0 0.0
    %982 = vmatprep.subr.mxu0 0.0
    %983 = vmatpush1.msra.mxu0 0.0
    %984 = vmatprep.subr.mxu0 0.0
    %985 = vmatpush1.msra.mxu0 0.0
    %986 = vmatprep.subr.mxu0 0.0
    %987 = vmatpush1.msra.mxu0 0.0
    %988 = vmatprep.subr.mxu0 0.0
    %989 = vmatpush1.msra.mxu0 0.0
    %990 = vmatprep.subr.mxu0 0.0
    %991 = vmatpush1.msra.mxu0 0.0
    %992 = vmatprep.subr.mxu0 0.0
    %993 = vmatpush1.msra.mxu0 0.0
    %994 = vmatprep.subr.mxu0 0.0
    %995 = vmatpush1.msra.mxu0 0.0
    %996 = vmatprep.subr.mxu0 0.0
    %997 = vmatpush1.msra.mxu0 0.0
    %998 = vmatprep.subr.mxu0 0.0
    %999 = vmatpush1.msra.mxu0 0.0
    %1000 = vmatprep.subr.mxu0 0.0
    %1001 = vmatpush1.msra.mxu0 0.0
    %1002 = vmatprep.subr.mxu0 0.0
    %1003 = vmatpush1.msra.mxu0 0.0
    %1004 = vmatprep.subr.mxu0 0.0
    %1005 = vmatpush1.msra.mxu0 0.0
    %1006 = vmatprep.subr.mxu0 0.0
    %1007 = vmatpush1.msra.mxu0 0.0
    %1008 = vmatprep.subr.mxu0 0.0
    %1009 = vmatpush1.msra.mxu0 0.0
    %1010 = vmatprep.subr.mxu0 0.0
    %1011 = vmatpush1.msra.mxu0 0.0
    %1012 = vmatprep.subr.mxu0 0.0
    %1013 = vmatpush1.msra.mxu0 0.0
    %1014 = vmatprep.subr.mxu0 0.0
    %1015 = vmatpush1.msra.mxu0 0.0
    %1016 = vmatprep.subr.mxu0 0.0
    %1017 = vmatpush1.msra.mxu0 0.0
    %1018 = vmatprep.subr.mxu0 0.0
    %1019 = vmatpush1.msra.mxu0 0.0
    %1020 = vmatprep.subr.mxu0 0.0
    %1021 = vmatpush1.msra.mxu0 0.0
    %1022 = vmatprep.mubr.f32.mxu0 0.0
    %1023 = vmatmul.mubr.f32.gmra.mrb[0].mxu0 %v816
    %v1024 = vpop.f32.mrb[0].mxu0
    %v1025 = vadd.f32 %v236, %v1024
    %v1026 = vpop.f32.mrb[0].mxu0
    %1027 = vdwg.mxu0
    %v1028 = vadd.f32 %v812, %v885
    %v1029 = vxor.u32 %v1028, 2147483648
    %v1030 = vmul.f32 %v1029, 1.442695
    %v1031 = vpow.pop %v1030
    %v1032 = vadd.f32 %v1031, 1.0
    %v1033 = vrcp.pop %v1032
    %v1034 = vmul.f32 1.0, %v1033
    %v1035 = vadd.f32 %v813, %v955
    %v1036 = vxor.u32 %v1035, 2147483648
    %v1037 = vmul.f32 %v1036, 1.442695
    %v1038 = vpow.pop %v1037
    %v1039 = vadd.f32 %v1038, 1.0
    %v1040 = vrcp.pop %v1039
    %v1041 = vmul.f32 1.0, %v1040
    %v1042 = vmul.f32 %v1034, %v1025
    %v1043 = vadd.f32 %v814, %v1042
    %v1044 = vtanh.pop %v1043
    %v1045 = vsub.f32 1.0, %v1041
    %v1046 = vmul.f32 %v1045, %v1044
    %v1047 = vmul.f32 %v1041, %v808
    %v1048 = vadd.f32 %v1046, %v1047
    %s1049 = scalar_lea.vmem [#allocation8], 6
    %1050 = vst.msk [vmem:[%s1049] sm:$0x3] %vm329, %v1048
    %s1051 = scalar_lea.vmem [#allocation3], 24
    %v1052 = vld [vmem:[%s1051] sm:$0x3]
    %v1053 = vld [vmem:[%s1051 + $0x2] sm:$0x3]
    %v1054 = vld [vmem:[%s1051 + $0x4] sm:$0x3]
    %v1056 = vsel %vm82, %v1048, 0
    %1058 = vmatprep.subr.mxu0 0.0
    %1059 = vmatpush1.msra.mxu0 %v53
    %1060 = vmatprep.subr.mxu0 0.0
    %1061 = vmatpush1.msra.mxu0 %v54
    %1062 = vmatprep.subr.mxu0 0.0
    %1063 = vmatpush1.msra.mxu0 %v55
    %1064 = vmatprep.subr.mxu0 0.0
    %1065 = vmatpush1.msra.mxu0 %v56
    %1066 = vmatprep.subr.mxu0 0.0
    %1067 = vmatpush1.msra.mxu0 0.0
    %1068 = vmatprep.subr.mxu0 0.0
    %1069 = vmatpush1.msra.mxu0 0.0
    %1070 = vmatprep.subr.mxu0 0.0
    %1071 = vmatpush1.msra.mxu0 0.0
    %1072 = vmatprep.subr.mxu0 0.0
    %1073 = vmatpush1.msra.mxu0 0.0
    %1074 = vmatprep.subr.mxu0 0.0
    %1075 = vmatpush1.msra.mxu0 0.0
    %1076 = vmatprep.subr.mxu0 0.0
    %1077 = vmatpush1.msra.mxu0 0.0
    %1078 = vmatprep.subr.mxu0 0.0
    %1079 = vmatpush1.msra.mxu0 0.0
    %1080 = vmatprep.subr.mxu0 0.0
    %1081 = vmatpush1.msra.mxu0 0.0
    %1082 = vmatprep.subr.mxu0 0.0
    %1083 = vmatpush1.msra.mxu0 0.0
    %1084 = vmatprep.subr.mxu0 0.0
    %1085 = vmatpush1.msra.mxu0 0.0
    %1086 = vmatprep.subr.mxu0 0.0
    %1087 = vmatpush1.msra.mxu0 0.0
    %1088 = vmatprep.subr.mxu0 0.0
    %1089 = vmatpush1.msra.mxu0 0.0
    %1090 = vmatprep.subr.mxu0 0.0
    %1091 = vmatpush1.msra.mxu0 0.0
    %1092 = vmatprep.subr.mxu0 0.0
    %1093 = vmatpush1.msra.mxu0 0.0
    %1094 = vmatprep.subr.mxu0 0.0
    %1095 = vmatpush1.msra.mxu0 0.0
    %1096 = vmatprep.subr.mxu0 0.0
    %1097 = vmatpush1.msra.mxu0 0.0
    %1098 = vmatprep.subr.mxu0 0.0
    %1099 = vmatpush1.msra.mxu0 0.0
    %1100 = vmatprep.subr.mxu0 0.0
    %1101 = vmatpush1.msra.mxu0 0.0
    %1102 = vmatprep.subr.mxu0 0.0
    %1103 = vmatpush1.msra.mxu0 0.0
    %1104 = vmatprep.subr.mxu0 0.0
    %1105 = vmatpush1.msra.mxu0 0.0
    %1106 = vmatprep.subr.mxu0 0.0
    %1107 = vmatpush1.msra.mxu0 0.0
    %1108 = vmatprep.subr.mxu0 0.0
    %1109 = vmatpush1.msra.mxu0 0.0
    %1110 = vmatprep.subr.mxu0 0.0
    %1111 = vmatpush1.msra.mxu0 0.0
    %1112 = vmatprep.subr.mxu0 0.0
    %1113 = vmatpush1.msra.mxu0 0.0
    %1114 = vmatprep.subr.mxu0 0.0
    %1115 = vmatpush1.msra.mxu0 0.0
    %1116 = vmatprep.subr.mxu0 0.0
    %1117 = vmatpush1.msra.mxu0 0.0
    %1118 = vmatprep.subr.mxu0 0.0
    %1119 = vmatpush1.msra.mxu0 0.0
    %1120 = vmatprep.subr.mxu0 0.0
    %1121 = vmatpush1.msra.mxu0 0.0
    %1122 = vmatprep.mubr.f32.mxu0 0.0
    %1123 = vmatmul.mubr.f32.gmra.mrb[0].mxu0 %v1056
    %v1124 = vpop.f32.mrb[0].mxu0
    %v1125 = vadd.f32 %v80, %v1124
    %v1126 = vpop.f32.mrb[0].mxu0
    %1127 = vdwg.mxu0
    %1128 = vmatprep.subr.mxu0 0.0
    %1129 = vmatpush1.msra.mxu0 %v58
    %1130 = vmatprep.subr.mxu0 0.0
    %1131 = vmatpush1.msra.mxu0 %v59
    %1132 = vmatprep.subr.mxu0 0.0
    %1133 = vmatpush1.msra.mxu0 %v60
    %1134 = vmatprep.subr.mxu0 0.0
    %1135 = vmatpush1.msra.mxu0 %v61
    %1136 = vmatprep.subr.mxu0 0.0
    %1137 = vmatpush1.msra.mxu0 0.0
    %1138 = vmatprep.subr.mxu0 0.0
    %1139 = vmatpush1.msra.mxu0 0.0
    %1140 = vmatprep.subr.mxu0 0.0
    %1141 = vmatpush1.msra.mxu0 0.0
    %1142 = vmatprep.subr.mxu0 0.0
    %1143 = vmatpush1.msra.mxu0 0.0
    %1144 = vmatprep.subr.mxu0 0.0
    %1145 = vmatpush1.msra.mxu0 0.0
    %1146 = vmatprep.subr.mxu0 0.0
    %1147 = vmatpush1.msra.mxu0 0.0
    %1148 = vmatprep.subr.mxu0 0.0
    %1149 = vmatpush1.msra.mxu0 0.0
    %1150 = vmatprep.subr.mxu0 0.0
    %1151 = vmatpush1.msra.mxu0 0.0
    %1152 = vmatprep.subr.mxu0 0.0
    %1153 = vmatpush1.msra.mxu0 0.0
    %1154 = vmatprep.subr.mxu0 0.0
    %1155 = vmatpush1.msra.mxu0 0.0
    %1156 = vmatprep.subr.mxu0 0.0
    %1157 = vmatpush1.msra.mxu0 0.0
    %1158 = vmatprep.subr.mxu0 0.0
    %1159 = vmatpush1.msra.mxu0 0.0
    %1160 = vmatprep.subr.mxu0 0.0
    %1161 = vmatpush1.msra.mxu0 0.0
    %1162 = vmatprep.subr.mxu0 0.0
    %1163 = vmatpush1.msra.mxu0 0.0
    %1164 = vmatprep.subr.mxu0 0.0
    %1165 = vmatpush1.msra.mxu0 0.0
    %1166 = vmatprep.subr.mxu0 0.0
    %1167 = vmatpush1.msra.mxu0 0.0
    %1168 = vmatprep.subr.mxu0 0.0
    %1169 = vmatpush1.msra.mxu0 0.0
    %1170 = vmatprep.subr.mxu0 0.0
    %1171 = vmatpush1.msra.mxu0 0.0
    %1172 = vmatprep.subr.mxu0 0.0
    %1173 = vmatpush1.msra.mxu0 0.0
    %1174 = vmatprep.subr.mxu0 0.0
    %1175 = vmatpush1.msra.mxu0 0.0
    %1176 = vmatprep.subr.mxu0 0.0
    %1177 = vmatpush1.msra.mxu0 0.0
    %1178 = vmatprep.subr.mxu0 0.0
    %1179 = vmatpush1.msra.mxu0 0.0
    %1180 = vmatprep.subr.mxu0 0.0
    %1181 = vmatpush1.msra.mxu0 0.0
    %1182 = vmatprep.subr.mxu0 0.0
    %1183 = vmatpush1.msra.mxu0 0.0
    %1184 = vmatprep.subr.mxu0 0.0
    %1185 = vmatpush1.msra.mxu0 0.0
    %1186 = vmatprep.subr.mxu0 0.0
    %1187 = vmatpush1.msra.mxu0 0.0
    %1188 = vmatprep.subr.mxu0 0.0
    %1189 = vmatpush1.msra.mxu0 0.0
    %1190 = vmatprep.subr.mxu0 0.0
    %1191 = vmatpush1.msra.mxu0 0.0
    %1192 = vmatprep.mubr.f32.mxu0 0.0
    %1193 = vmatmul.mubr.f32.gmra.mrb[0].mxu0 %v1056
    %v1194 = vpop.f32.mrb[0].mxu0
    %v1195 = vadd.f32 %v160, %v1194
    %v1196 = vpop.f32.mrb[0].mxu0
    %1197 = vdwg.mxu0
    %1198 = vmatprep.subr.mxu0 0.0
    %1199 = vmatpush1.msra.mxu0 %v63
    %1200 = vmatprep.subr.mxu0 0.0
    %1201 = vmatpush1.msra.mxu0 %v64
    %1202 = vmatprep.subr.mxu0 0.0
    %1203 = vmatpush1.msra.mxu0 %v65
    %1204 = vmatprep.subr.mxu0 0.0
    %1205 = vmatpush1.msra.mxu0 %v66
    %1206 = vmatprep.subr.mxu0 0.0
    %1207 = vmatpush1.msra.mxu0 0.0
    %1208 = vmatprep.subr.mxu0 0.0
    %1209 = vmatpush1.msra.mxu0 0.0
    %1210 = vmatprep.subr.mxu0 0.0
    %1211 = vmatpush1.msra.mxu0 0.0
    %1212 = vmatprep.subr.mxu0 0.0
    %1213 = vmatpush1.msra.mxu0 0.0
    %1214 = vmatprep.subr.mxu0 0.0
    %1215 = vmatpush1.msra.mxu0 0.0
    %1216 = vmatprep.subr.mxu0 0.0
    %1217 = vmatpush1.msra.mxu0 0.0
    %1218 = vmatprep.subr.mxu0 0.0
    %1219 = vmatpush1.msra.mxu0 0.0
    %1220 = vmatprep.subr.mxu0 0.0
    %1221 = vmatpush1.msra.mxu0 0.0
    %1222 = vmatprep.subr.mxu0 0.0
    %1223 = vmatpush1.msra.mxu0 0.0
    %1224 = vmatprep.subr.mxu0 0.0
    %1225 = vmatpush1.msra.mxu0 0.0
    %1226 = vmatprep.subr.mxu0 0.0
    %1227 = vmatpush1.msra.mxu0 0.0
    %1228 = vmatprep.subr.mxu0 0.0
    %1229 = vmatpush1.msra.mxu0 0.0
    %1230 = vmatprep.subr.mxu0 0.0
    %1231 = vmatpush1.msra.mxu0 0.0
    %1232 = vmatprep.subr.mxu0 0.0
    %1233 = vmatpush1.msra.mxu0 0.0
    %1234 = vmatprep.subr.mxu0 0.0
    %1235 = vmatpush1.msra.mxu0 0.0
    %1236 = vmatprep.subr.mxu0 0.0
    %1237 = vmatpush1.msra.mxu0 0.0
    %1238 = vmatprep.subr.mxu0 0.0
    %1239 = vmatpush1.msra.mxu0 0.0
    %1240 = vmatprep.subr.mxu0 0.0
    %1241 = vmatpush1.msra.mxu0 0.0
    %1242 = vmatprep.subr.mxu0 0.0
    %1243 = vmatpush1.msra.mxu0 0.0
    %1244 = vmatprep.subr.mxu0 0.0
    %1245 = vmatpush1.msra.mxu0 0.0
    %1246 = vmatprep.subr.mxu0 0.0
    %1247 = vmatpush1.msra.mxu0 0.0
    %1248 = vmatprep.subr.mxu0 0.0
    %1249 = vmatpush1.msra.mxu0 0.0
    %1250 = vmatprep.subr.mxu0 0.0
    %1251 = vmatpush1.msra.mxu0 0.0
    %1252 = vmatprep.subr.mxu0 0.0
    %1253 = vmatpush1.msra.mxu0 0.0
    %1254 = vmatprep.subr.mxu0 0.0
    %1255 = vmatpush1.msra.mxu0 0.0
    %1256 = vmatprep.subr.mxu0 0.0
    %1257 = vmatpush1.msra.mxu0 0.0
    %1258 = vmatprep.subr.mxu0 0.0
    %1259 = vmatpush1.msra.mxu0 0.0
    %1260 = vmatprep.subr.mxu0 0.0
    %1261 = vmatpush1.msra.mxu0 0.0
    %1262 = vmatprep.mubr.f32.mxu0 0.0
    %1263 = vmatmul.mubr.f32.gmra.mrb[0].mxu0 %v1056
    %v1264 = vpop.f32.mrb[0].mxu0
    %v1265 = vadd.f32 %v236, %v1264
    %v1266 = vpop.f32.mrb[0].mxu0
    %1267 = vdwg.mxu0
    %v1268 = vadd.f32 %v1052, %v1125
    %v1269 = vxor.u32 %v1268, 2147483648
    %v1270 = vmul.f32 %v1269, 1.442695
    %v1271 = vpow.pop %v1270
    %v1272 = vadd.f32 %v1271, 1.0
    %v1273 = vrcp.pop %v1272
    %v1274 = vmul.f32 1.0, %v1273
    %v1275 = vadd.f32 %v1053, %v1195
    %v1276 = vxor.u32 %v1275, 2147483648
    %v1277 = vmul.f32 %v1276, 1.442695
    %v1278 = vpow.pop %v1277
    %v1279 = vadd.f32 %v1278, 1.0
    %v1280 = vrcp.pop %v1279
    %v1281 = vmul.f32 1.0, %v1280
    %v1282 = vmul.f32 %v1274, %v1265
    %v1283 = vadd.f32 %v1054, %v1282
    %v1284 = vtanh.pop %v1283
    %v1285 = vsub.f32 1.0, %v1281
    %v1286 = vmul.f32 %v1285, %v1284
    %v1287 = vmul.f32 %v1281, %v1048
    %v1288 = vadd.f32 %v1286, %v1287
    %s1289 = scalar_lea.vmem [#allocation8], 8
    %1290 = vst.msk [vmem:[%s1289] sm:$0x3] %vm329, %v1288
    %s1291 = scalar_lea.vmem [#allocation3], 30
    %v1292 = vld [vmem:[%s1291] sm:$0x3]
    %v1293 = vld [vmem:[%s1291 + $0x2] sm:$0x3]
    %v1294 = vld [vmem:[%s1291 + $0x4] sm:$0x3]
    %v1296 = vsel %vm82, %v1288, 0
    %1298 = vmatprep.subr.mxu0 0.0
    %1299 = vmatpush1.msra.mxu0 %v53
    %1300 = vmatprep.subr.mxu0 0.0
    %1301 = vmatpush1.msra.mxu0 %v54
    %1302 = vmatprep.subr.mxu0 0.0
    %1303 = vmatpush1.msra.mxu0 %v55
    %1304 = vmatprep.subr.mxu0 0.0
    %1305 = vmatpush1.msra.mxu0 %v56
    %1306 = vmatprep.subr.mxu0 0.0
    %1307 = vmatpush1.msra.mxu0 0.0
    %1308 = vmatprep.subr.mxu0 0.0
    %1309 = vmatpush1.msra.mxu0 0.0
    %1310 = vmatprep.subr.mxu0 0.0
    %1311 = vmatpush1.msra.mxu0 0.0
    %1312 = vmatprep.subr.mxu0 0.0
    %1313 = vmatpush1.msra.mxu0 0.0
    %1314 = vmatprep.subr.mxu0 0.0
    %1315 = vmatpush1.msra.mxu0 0.0
    %1316 = vmatprep.subr.mxu0 0.0
    %1317 = vmatpush1.msra.mxu0 0.0
    %1318 = vmatprep.subr.mxu0 0.0
    %1319 = vmatpush1.msra.mxu0 0.0
    %1320 = vmatprep.subr.mxu0 0.0
    %1321 = vmatpush1.msra.mxu0 0.0
    %1322 = vmatprep.subr.mxu0 0.0
    %1323 = vmatpush1.msra.mxu0 0.0
    %1324 = vmatprep.subr.mxu0 0.0
    %1325 = vmatpush1.msra.mxu0 0.0
    %1326 = vmatprep.subr.mxu0 0.0
    %1327 = vmatpush1.msra.mxu0 0.0
    %1328 = vmatprep.subr.mxu0 0.0
    %1329 = vmatpush1.msra.mxu0 0.0
    %1330 = vmatprep.subr.mxu0 0.0
    %1331 = vmatpush1.msra.mxu0 0.0
    %1332 = vmatprep.subr.mxu0 0.0
    %1333 = vmatpush1.msra.mxu0 0.0
    %1334 = vmatprep.subr.mxu0 0.0
    %1335 = vmatpush1.msra.mxu0 0.0
    %1336 = vmatprep.subr.mxu0 0.0
    %1337 = vmatpush1.msra.mxu0 0.0
    %1338 = vmatprep.subr.mxu0 0.0
    %1339 = vmatpush1.msra.mxu0 0.0
    %1340 = vmatprep.subr.mxu0 0.0
    %1341 = vmatpush1.msra.mxu0 0.0
    %1342 = vmatprep.subr.mxu0 0.0
    %1343 = vmatpush1.msra.mxu0 0.0
    %1344 = vmatprep.subr.mxu0 0.0
    %1345 = vmatpush1.msra.mxu0 0.0
    %1346 = vmatprep.subr.mxu0 0.0
    %1347 = vmatpush1.msra.mxu0 0.0
    %1348 = vmatprep.subr.mxu0 0.0
    %1349 = vmatpush1.msra.mxu0 0.0
    %1350 = vmatprep.subr.mxu0 0.0
    %1351 = vmatpush1.msra.mxu0 0.0
    %1352 = vmatprep.subr.mxu0 0.0
    %1353 = vmatpush1.msra.mxu0 0.0
    %1354 = vmatprep.subr.mxu0 0.0
    %1355 = vmatpush1.msra.mxu0 0.0
    %1356 = vmatprep.subr.mxu0 0.0
    %1357 = vmatpush1.msra.mxu0 0.0
    %1358 = vmatprep.subr.mxu0 0.0
    %1359 = vmatpush1.msra.mxu0 0.0
    %1360 = vmatprep.subr.mxu0 0.0
    %1361 = vmatpush1.msra.mxu0 0.0
    %1362 = vmatprep.mubr.f32.mxu0 0.0
    %1363 = vmatmul.mubr.f32.gmra.mrb[0].mxu0 %v1296
    %v1364 = vpop.f32.mrb[0].mxu0
    %v1365 = vadd.f32 %v80, %v1364
    %v1366 = vpop.f32.mrb[0].mxu0
    %1367 = vdwg.mxu0
    %1368 = vmatprep.subr.mxu0 0.0
    %1369 = vmatpush1.msra.mxu0 %v58
    %1370 = vmatprep.subr.mxu0 0.0
    %1371 = vmatpush1.msra.mxu0 %v59
    %1372 = vmatprep.subr.mxu0 0.0
    %1373 = vmatpush1.msra.mxu0 %v60
    %1374 = vmatprep.subr.mxu0 0.0
    %1375 = vmatpush1.msra.mxu0 %v61
    %1376 = vmatprep.subr.mxu0 0.0
    %1377 = vmatpush1.msra.mxu0 0.0
    %1378 = vmatprep.subr.mxu0 0.0
    %1379 = vmatpush1.msra.mxu0 0.0
    %1380 = vmatprep.subr.mxu0 0.0
    %1381 = vmatpush1.msra.mxu0 0.0
    %1382 = vmatprep.subr.mxu0 0.0
    %1383 = vmatpush1.msra.mxu0 0.0
    %1384 = vmatprep.subr.mxu0 0.0
    %1385 = vmatpush1.msra.mxu0 0.0
    %1386 = vmatprep.subr.mxu0 0.0
    %1387 = vmatpush1.msra.mxu0 0.0
    %1388 = vmatprep.subr.mxu0 0.0
    %1389 = vmatpush1.msra.mxu0 0.0
    %1390 = vmatprep.subr.mxu0 0.0
    %1391 = vmatpush1.msra.mxu0 0.0
    %1392 = vmatprep.subr.mxu0 0.0
    %1393 = vmatpush1.msra.mxu0 0.0
    %1394 = vmatprep.subr.mxu0 0.0
    %1395 = vmatpush1.msra.mxu0 0.0
    %1396 = vmatprep.subr.mxu0 0.0
    %1397 = vmatpush1.msra.mxu0 0.0
    %1398 = vmatprep.subr.mxu0 0.0
    %1399 = vmatpush1.msra.mxu0 0.0
    %1400 = vmatprep.subr.mxu0 0.0
    %1401 = vmatpush1.msra.mxu0 0.0
    %1402 = vmatprep.subr.mxu0 0.0
    %1403 = vmatpush1.msra.mxu0 0.0
    %1404 = vmatprep.subr.mxu0 0.0
    %1405 = vmatpush1.msra.mxu0 0.0
    %1406 = vmatprep.subr.mxu0 0.0
    %1407 = vmatpush1.msra.mxu0 0.0
    %1408 = vmatprep.subr.mxu0 0.0
    %1409 = vmatpush1.msra.mxu0 0.0
    %1410 = vmatprep.subr.mxu0 0.0
    %1411 = vmatpush1.msra.mxu0 0.0
    %1412 = vmatprep.subr.mxu0 0.0
    %1413 = vmatpush1.msra.mxu0 0.0
    %1414 = vmatprep.subr.mxu0 0.0
    %1415 = vmatpush1.msra.mxu0 0.0
    %1416 = vmatprep.subr.mxu0 0.0
    %1417 = vmatpush1.msra.mxu0 0.0
    %1418 = vmatprep.subr.mxu0 0.0
    %1419 = vmatpush1.msra.mxu0 0.0
    %1420 = vmatprep.subr.mxu0 0.0
    %1421 = vmatpush1.msra.mxu0 0.0
    %1422 = vmatprep.subr.mxu0 0.0
    %1423 = vmatpush1.msra.mxu0 0.0
    %1424 = vmatprep.subr.mxu0 0.0
    %1425 = vmatpush1.msra.mxu0 0.0
    %1426 = vmatprep.subr.mxu0 0.0
    %1427 = vmatpush1.msra.mxu0 0.0
    %1428 = vmatprep.subr.mxu0 0.0
    %1429 = vmatpush1.msra.mxu0 0.0
    %1430 = vmatprep.subr.mxu0 0.0
    %1431 = vmatpush1.msra.mxu0 0.0
    %1432 = vmatprep.mubr.f32.mxu0 0.0
    %1433 = vmatmul.mubr.f32.gmra.mrb[0].mxu0 %v1296
    %v1434 = vpop.f32.mrb[0].mxu0
    %v1435 = vadd.f32 %v160, %v1434
    %v1436 = vpop.f32.mrb[0].mxu0
    %1437 = vdwg.mxu0
    %1438 = vmatprep.subr.mxu0 0.0
    %1439 = vmatpush1.msra.mxu0 %v63
    %1440 = vmatprep.subr.mxu0 0.0
    %1441 = vmatpush1.msra.mxu0 %v64
    %1442 = vmatprep.subr.mxu0 0.0
    %1443 = vmatpush1.msra.mxu0 %v65
    %1444 = vmatprep.subr.mxu0 0.0
    %1445 = vmatpush1.msra.mxu0 %v66
    %1446 = vmatprep.subr.mxu0 0.0
    %1447 = vmatpush1.msra.mxu0 0.0
    %1448 = vmatprep.subr.mxu0 0.0
    %1449 = vmatpush1.msra.mxu0 0.0
    %1450 = vmatprep.subr.mxu0 0.0
    %1451 = vmatpush1.msra.mxu0 0.0
    %1452 = vmatprep.subr.mxu0 0.0
    %1453 = vmatpush1.msra.mxu0 0.0
    %1454 = vmatprep.subr.mxu0 0.0
    %1455 = vmatpush1.msra.mxu0 0.0
    %1456 = vmatprep.subr.mxu0 0.0
    %1457 = vmatpush1.msra.mxu0 0.0
    %1458 = vmatprep.subr.mxu0 0.0
    %1459 = vmatpush1.msra.mxu0 0.0
    %1460 = vmatprep.subr.mxu0 0.0
    %1461 = vmatpush1.msra.mxu0 0.0
    %1462 = vmatprep.subr.mxu0 0.0
    %1463 = vmatpush1.msra.mxu0 0.0
    %1464 = vmatprep.subr.mxu0 0.0
    %1465 = vmatpush1.msra.mxu0 0.0
    %1466 = vmatprep.subr.mxu0 0.0
    %1467 = vmatpush1.msra.mxu0 0.0
    %1468 = vmatprep.subr.mxu0 0.0
    %1469 = vmatpush1.msra.mxu0 0.0
    %1470 = vmatprep.subr.mxu0 0.0
    %1471 = vmatpush1.msra.mxu0 0.0
    %1472 = vmatprep.subr.mxu0 0.0
    %1473 = vmatpush1.msra.mxu0 0.0
    %1474 = vmatprep.subr.mxu0 0.0
    %1475 = vmatpush1.msra.mxu0 0.0
    %1476 = vmatprep.subr.mxu0 0.0
    %1477 = vmatpush1.msra.mxu0 0.0
    %1478 = vmatprep.subr.mxu0 0.0
    %1479 = vmatpush1.msra.mxu0 0.0
    %1480 = vmatprep.subr.mxu0 0.0
    %1481 = vmatpush1.msra.mxu0 0.0
    %1482 = vmatprep.subr.mxu0 0.0
    %1483 = vmatpush1.msra.mxu0 0.0
    %1484 = vmatprep.subr.mxu0 0.0
    %1485 = vmatpush1.msra.mxu0 0.0
    %1486 = vmatprep.subr.mxu0 0.0
    %1487 = vmatpush1.msra.mxu0 0.0
    %1488 = vmatprep.subr.mxu0 0.0
    %1489 = vmatpush1.msra.mxu0 0.0
    %1490 = vmatprep.subr.mxu0 0.0
    %1491 = vmatpush1.msra.mxu0 0.0
    %1492 = vmatprep.subr.mxu0 0.0
    %1493 = vmatpush1.msra.mxu0 0.0
    %1494 = vmatprep.subr.mxu0 0.0
    %1495 = vmatpush1.msra.mxu0 0.0
    %1496 = vmatprep.subr.mxu0 0.0
    %1497 = vmatpush1.msra.mxu0 0.0
    %1498 = vmatprep.subr.mxu0 0.0
    %1499 = vmatpush1.msra.mxu0 0.0
    %1500 = vmatprep.subr.mxu0 0.0
    %1501 = vmatpush1.msra.mxu0 0.0
    %1502 = vmatprep.mubr.f32.mxu0 0.0
    %1503 = vmatmul.mubr.f32.gmra.mrb[0].mxu0 %v1296
    %v1504 = vpop.f32.mrb[0].mxu0
    %v1505 = vadd.f32 %v236, %v1504
    %v1506 = vpop.f32.mrb[0].mxu0
    %1507 = vdwg.mxu0
    %v1508 = vadd.f32 %v1292, %v1365
    %v1509 = vxor.u32 %v1508, 2147483648
    %v1510 = vmul.f32 %v1509, 1.442695
    %v1511 = vpow.pop %v1510
    %v1512 = vadd.f32 %v1511, 1.0
    %v1513 = vrcp.pop %v1512
    %v1514 = vmul.f32 1.0, %v1513
    %v1515 = vadd.f32 %v1293, %v1435
    %v1516 = vxor.u32 %v1515, 2147483648
    %v1517 = vmul.f32 %v1516, 1.442695
    %v1518 = vpow.pop %v1517
    %v1519 = vadd.f32 %v1518, 1.0
    %v1520 = vrcp.pop %v1519
    %v1521 = vmul.f32 1.0, %v1520
    %v1522 = vmul.f32 %v1514, %v1505
    %v1523 = vadd.f32 %v1294, %v1522
    %v1524 = vtanh.pop %v1523
    %v1525 = vsub.f32 1.0, %v1521
    %v1526 = vmul.f32 %v1525, %v1524
    %v1527 = vmul.f32 %v1521, %v1288
    %v1528 = vadd.f32 %v1526, %v1527
    %s1529 = scalar_lea.vmem [#allocation8], 10
    %1530 = vst.msk [vmem:[%s1529] sm:$0x3] %vm329, %v1528
    %s1531 = scalar_lea.vmem [#allocation3], 36
    %v1532 = vld [vmem:[%s1531] sm:$0x3]
    %v1533 = vld [vmem:[%s1531 + $0x2] sm:$0x3]
    %v1534 = vld [vmem:[%s1531 + $0x4] sm:$0x3]
    %v1536 = vsel %vm82, %v1528, 0
    %1538 = vmatprep.subr.mxu0 0.0
    %1539 = vmatpush1.msra.mxu0 %v53
    %1540 = vmatprep.subr.mxu0 0.0
    %1541 = vmatpush1.msra.mxu0 %v54
    %1542 = vmatprep.subr.mxu0 0.0
    %1543 = vmatpush1.msra.mxu0 %v55
    %1544 = vmatprep.subr.mxu0 0.0
    %1545 = vmatpush1.msra.mxu0 %v56
    %1546 = vmatprep.subr.mxu0 0.0
    %1547 = vmatpush1.msra.mxu0 0.0
    %1548 = vmatprep.subr.mxu0 0.0
    %1549 = vmatpush1.msra.mxu0 0.0
    %1550 = vmatprep.subr.mxu0 0.0
    %1551 = vmatpush1.msra.mxu0 0.0
    %1552 = vmatprep.subr.mxu0 0.0
    %1553 = vmatpush1.msra.mxu0 0.0
    %1554 = vmatprep.subr.mxu0 0.0
    %1555 = vmatpush1.msra.mxu0 0.0
    %1556 = vmatprep.subr.mxu0 0.0
    %1557 = vmatpush1.msra.mxu0 0.0
    %1558 = vmatprep.subr.mxu0 0.0
    %1559 = vmatpush1.msra.mxu0 0.0
    %1560 = vmatprep.subr.mxu0 0.0
    %1561 = vmatpush1.msra.mxu0 0.0
    %1562 = vmatprep.subr.mxu0 0.0
    %1563 = vmatpush1.msra.mxu0 0.0
    %1564 = vmatprep.subr.mxu0 0.0
    %1565 = vmatpush1.msra.mxu0 0.0
    %1566 = vmatprep.subr.mxu0 0.0
    %1567 = vmatpush1.msra.mxu0 0.0
    %1568 = vmatprep.subr.mxu0 0.0
    %1569 = vmatpush1.msra.mxu0 0.0
    %1570 = vmatprep.subr.mxu0 0.0
    %1571 = vmatpush1.msra.mxu0 0.0
    %1572 = vmatprep.subr.mxu0 0.0
    %1573 = vmatpush1.msra.mxu0 0.0
    %1574 = vmatprep.subr.mxu0 0.0
    %1575 = vmatpush1.msra.mxu0 0.0
    %1576 = vmatprep.subr.mxu0 0.0
    %1577 = vmatpush1.msra.mxu0 0.0
    %1578 = vmatprep.subr.mxu0 0.0
    %1579 = vmatpush1.msra.mxu0 0.0
    %1580 = vmatprep.subr.mxu0 0.0
    %1581 = vmatpush1.msra.mxu0 0.0
    %1582 = vmatprep.subr.mxu0 0.0
    %1583 = vmatpush1.msra.mxu0 0.0
    %1584 = vmatprep.subr.mxu0 0.0
    %1585 = vmatpush1.msra.mxu0 0.0
    %1586 = vmatprep.subr.mxu0 0.0
    %1587 = vmatpush1.msra.mxu0 0.0
    %1588 = vmatprep.subr.mxu0 0.0
    %1589 = vmatpush1.msra.mxu0 0.0
    %1590 = vmatprep.subr.mxu0 0.0
    %1591 = vmatpush1.msra.mxu0 0.0
    %1592 = vmatprep.subr.mxu0 0.0
    %1593 = vmatpush1.msra.mxu0 0.0
    %1594 = vmatprep.subr.mxu0 0.0
    %1595 = vmatpush1.msra.mxu0 0.0
    %1596 = vmatprep.subr.mxu0 0.0
    %1597 = vmatpush1.msra.mxu0 0.0
    %1598 = vmatprep.subr.mxu0 0.0
    %1599 = vmatpush1.msra.mxu0 0.0
    %1600 = vmatprep.subr.mxu0 0.0
    %1601 = vmatpush1.msra.mxu0 0.0
    %1602 = vmatprep.mubr.f32.mxu0 0.0
    %1603 = vmatmul.mubr.f32.gmra.mrb[0].mxu0 %v1536
    %v1604 = vpop.f32.mrb[0].mxu0
    %v1605 = vadd.f32 %v80, %v1604
    %v1606 = vpop.f32.mrb[0].mxu0
    %1607 = vdwg.mxu0
    %1608 = vmatprep.subr.mxu0 0.0
    %1609 = vmatpush1.msra.mxu0 %v58
    %1610 = vmatprep.subr.mxu0 0.0
    %1611 = vmatpush1.msra.mxu0 %v59
    %1612 = vmatprep.subr.mxu0 0.0
    %1613 = vmatpush1.msra.mxu0 %v60
    %1614 = vmatprep.subr.mxu0 0.0
    %1615 = vmatpush1.msra.mxu0 %v61
    %1616 = vmatprep.subr.mxu0 0.0
    %1617 = vmatpush1.msra.mxu0 0.0
    %1618 = vmatprep.subr.mxu0 0.0
    %1619 = vmatpush1.msra.mxu0 0.0
    %1620 = vmatprep.subr.mxu0 0.0
    %1621 = vmatpush1.msra.mxu0 0.0
    %1622 = vmatprep.subr.mxu0 0.0
    %1623 = vmatpush1.msra.mxu0 0.0
    %1624 = vmatprep.subr.mxu0 0.0
    %1625 = vmatpush1.msra.mxu0 0.0
    %1626 = vmatprep.subr.mxu0 0.0
    %1627 = vmatpush1.msra.mxu0 0.0
    %1628 = vmatprep.subr.mxu0 0.0
    %1629 = vmatpush1.msra.mxu0 0.0
    %1630 = vmatprep.subr.mxu0 0.0
    %1631 = vmatpush1.msra.mxu0 0.0
    %1632 = vmatprep.subr.mxu0 0.0
    %1633 = vmatpush1.msra.mxu0 0.0
    %1634 = vmatprep.subr.mxu0 0.0
    %1635 = vmatpush1.msra.mxu0 0.0
    %1636 = vmatprep.subr.mxu0 0.0
    %1637 = vmatpush1.msra.mxu0 0.0
    %1638 = vmatprep.subr.mxu0 0.0
    %1639 = vmatpush1.msra.mxu0 0.0
    %1640 = vmatprep.subr.mxu0 0.0
    %1641 = vmatpush1.msra.mxu0 0.0
    %1642 = vmatprep.subr.mxu0 0.0
    %1643 = vmatpush1.msra.mxu0 0.0
    %1644 = vmatprep.subr.mxu0 0.0
    %1645 = vmatpush1.msra.mxu0 0.0
    %1646 = vmatprep.subr.mxu0 0.0
    %1647 = vmatpush1.msra.mxu0 0.0
    %1648 = vmatprep.subr.mxu0 0.0
    %1649 = vmatpush1.msra.mxu0 0.0
    %1650 = vmatprep.subr.mxu0 0.0
    %1651 = vmatpush1.msra.mxu0 0.0
    %1652 = vmatprep.subr.mxu0 0.0
    %1653 = vmatpush1.msra.mxu0 0.0
    %1654 = vmatprep.subr.mxu0 0.0
    %1655 = vmatpush1.msra.mxu0 0.0
    %1656 = vmatprep.subr.mxu0 0.0
    %1657 = vmatpush1.msra.mxu0 0.0
    %1658 = vmatprep.subr.mxu0 0.0
    %1659 = vmatpush1.msra.mxu0 0.0
    %1660 = vmatprep.subr.mxu0 0.0
    %1661 = vmatpush1.msra.mxu0 0.0
    %1662 = vmatprep.subr.mxu0 0.0
    %1663 = vmatpush1.msra.mxu0 0.0
    %1664 = vmatprep.subr.mxu0 0.0
    %1665 = vmatpush1.msra.mxu0 0.0
    %1666 = vmatprep.subr.mxu0 0.0
    %1667 = vmatpush1.msra.mxu0 0.0
    %1668 = vmatprep.subr.mxu0 0.0
    %1669 = vmatpush1.msra.mxu0 0.0
    %1670 = vmatprep.subr.mxu0 0.0
    %1671 = vmatpush1.msra.mxu0 0.0
    %1672 = vmatprep.mubr.f32.mxu0 0.0
    %1673 = vmatmul.mubr.f32.gmra.mrb[0].mxu0 %v1536
    %v1674 = vpop.f32.mrb[0].mxu0
    %v1675 = vadd.f32 %v160, %v1674
    %v1676 = vpop.f32.mrb[0].mxu0
    %1677 = vdwg.mxu0
    %1678 = vmatprep.subr.mxu0 0.0
    %1679 = vmatpush1.msra.mxu0 %v63
    %1680 = vmatprep.subr.mxu0 0.0
    %1681 = vmatpush1.msra.mxu0 %v64
    %1682 = vmatprep.subr.mxu0 0.0
    %1683 = vmatpush1.msra.mxu0 %v65
    %1684 = vmatprep.subr.mxu0 0.0
    %1685 = vmatpush1.msra.mxu0 %v66
    %1686 = vmatprep.subr.mxu0 0.0
    %1687 = vmatpush1.msra.mxu0 0.0
    %1688 = vmatprep.subr.mxu0 0.0
    %1689 = vmatpush1.msra.mxu0 0.0
    %1690 = vmatprep.subr.mxu0 0.0
    %1691 = vmatpush1.msra.mxu0 0.0
    %1692 = vmatprep.subr.mxu0 0.0
    %1693 = vmatpush1.msra.mxu0 0.0
    %1694 = vmatprep.subr.mxu0 0.0
    %1695 = vmatpush1.msra.mxu0 0.0
    %1696 = vmatprep.subr.mxu0 0.0
    %1697 = vmatpush1.msra.mxu0 0.0
    %1698 = vmatprep.subr.mxu0 0.0
    %1699 = vmatpush1.msra.mxu0 0.0
    %1700 = vmatprep.subr.mxu0 0.0
    %1701 = vmatpush1.msra.mxu0 0.0
    %1702 = vmatprep.subr.mxu0 0.0
    %1703 = vmatpush1.msra.mxu0 0.0
    %1704 = vmatprep.subr.mxu0 0.0
    %1705 = vmatpush1.msra.mxu0 0.0
    %1706 = vmatprep.subr.mxu0 0.0
    %1707 = vmatpush1.msra.mxu0 0.0
    %1708 = vmatprep.subr.mxu0 0.0
    %1709 = vmatpush1.msra.mxu0 0.0
    %1710 = vmatprep.subr.mxu0 0.0
    %1711 = vmatpush1.msra.mxu0 0.0
    %1712 = vmatprep.subr.mxu0 0.0
    %1713 = vmatpush1.msra.mxu0 0.0
    %1714 = vmatprep.subr.mxu0 0.0
    %1715 = vmatpush1.msra.mxu0 0.0
    %1716 = vmatprep.subr.mxu0 0.0
    %1717 = vmatpush1.msra.mxu0 0.0
    %1718 = vmatprep.subr.mxu0 0.0
    %1719 = vmatpush1.msra.mxu0 0.0
    %1720 = vmatprep.subr.mxu0 0.0
    %1721 = vmatpush1.msra.mxu0 0.0
    %1722 = vmatprep.subr.mxu0 0.0
    %1723 = vmatpush1.msra.mxu0 0.0
    %1724 = vmatprep.subr.mxu0 0.0
    %1725 = vmatpush1.msra.mxu0 0.0
    %1726 = vmatprep.subr.mxu0 0.0
    %1727 = vmatpush1.msra.mxu0 0.0
    %1728 = vmatprep.subr.mxu0 0.0
    %1729 = vmatpush1.msra.mxu0 0.0
    %1730 = vmatprep.subr.mxu0 0.0
    %1731 = vmatpush1.msra.mxu0 0.0
    %1732 = vmatprep.subr.mxu0 0.0
    %1733 = vmatpush1.msra.mxu0 0.0
    %1734 = vmatprep.subr.mxu0 0.0
    %1735 = vmatpush1.msra.mxu0 0.0
    %1736 = vmatprep.subr.mxu0 0.0
    %1737 = vmatpush1.msra.mxu0 0.0
    %1738 = vmatprep.subr.mxu0 0.0
    %1739 = vmatpush1.msra.mxu0 0.0
    %1740 = vmatprep.subr.mxu0 0.0
    %1741 = vmatpush1.msra.mxu0 0.0
    %1742 = vmatprep.mubr.f32.mxu0 0.0
    %1743 = vmatmul.mubr.f32.gmra.mrb[0].mxu0 %v1536
    %v1744 = vpop.f32.mrb[0].mxu0
    %v1745 = vadd.f32 %v236, %v1744
    %v1746 = vpop.f32.mrb[0].mxu0
    %1747 = vdwg.mxu0
    %v1748 = vadd.f32 %v1532, %v1605
    %v1749 = vxor.u32 %v1748, 2147483648
    %v1750 = vmul.f32 %v1749, 1.442695
    %v1751 = vpow.pop %v1750
    %v1752 = vadd.f32 %v1751, 1.0
    %v1753 = vrcp.pop %v1752
    %v1754 = vmul.f32 1.0, %v1753
    %v1755 = vadd.f32 %v1533, %v1675
    %v1756 = vxor.u32 %v1755, 2147483648
    %v1757 = vmul.f32 %v1756, 1.442695
    %v1758 = vpow.pop %v1757
    %v1759 = vadd.f32 %v1758, 1.0
    %v1760 = vrcp.pop %v1759
    %v1761 = vmul.f32 1.0, %v1760
    %v1762 = vmul.f32 %v1754, %v1745
    %v1763 = vadd.f32 %v1534, %v1762
    %v1764 = vtanh.pop %v1763
    %v1765 = vsub.f32 1.0, %v1761
    %v1766 = vmul.f32 %v1765, %v1764
    %v1767 = vmul.f32 %v1761, %v1528
    %v1768 = vadd.f32 %v1766, %v1767
    %s1769 = scalar_lea.vmem [#allocation8], 12
    %1770 = vst.msk [vmem:[%s1769] sm:$0x3] %vm329, %v1768
    %s1771 = scalar_lea.vmem [#allocation3], 42
    %v1772 = vld [vmem:[%s1771] sm:$0x3]
    %v1773 = vld [vmem:[%s1771 + $0x2] sm:$0x3]
    %v1774 = vld [vmem:[%s1771 + $0x4] sm:$0x3]
    %v1776 = vsel %vm82, %v1768, 0
    %1778 = vmatprep.subr.mxu0 0.0
    %1779 = vmatpush1.msra.mxu0 %v53
    %1780 = vmatprep.subr.mxu0 0.0
    %1781 = vmatpush1.msra.mxu0 %v54
    %1782 = vmatprep.subr.mxu0 0.0
    %1783 = vmatpush1.msra.mxu0 %v55
    %1784 = vmatprep.subr.mxu0 0.0
    %1785 = vmatpush1.msra.mxu0 %v56
    %1786 = vmatprep.subr.mxu0 0.0
    %1787 = vmatpush1.msra.mxu0 0.0
    %1788 = vmatprep.subr.mxu0 0.0
    %1789 = vmatpush1.msra.mxu0 0.0
    %1790 = vmatprep.subr.mxu0 0.0
    %1791 = vmatpush1.msra.mxu0 0.0
    %1792 = vmatprep.subr.mxu0 0.0
    %1793 = vmatpush1.msra.mxu0 0.0
    %1794 = vmatprep.subr.mxu0 0.0
    %1795 = vmatpush1.msra.mxu0 0.0
    %1796 = vmatprep.subr.mxu0 0.0
    %1797 = vmatpush1.msra.mxu0 0.0
    %1798 = vmatprep.subr.mxu0 0.0
    %1799 = vmatpush1.msra.mxu0 0.0
    %1800 = vmatprep.subr.mxu0 0.0
    %1801 = vmatpush1.msra.mxu0 0.0
    %1802 = vmatprep.subr.mxu0 0.0
    %1803 = vmatpush1.msra.mxu0 0.0
    %1804 = vmatprep.subr.mxu0 0.0
    %1805 = vmatpush1.msra.mxu0 0.0
    %1806 = vmatprep.subr.mxu0 0.0
    %1807 = vmatpush1.msra.mxu0 0.0
    %1808 = vmatprep.subr.mxu0 0.0
    %1809 = vmatpush1.msra.mxu0 0.0
    %1810 = vmatprep.subr.mxu0 0.0
    %1811 = vmatpush1.msra.mxu0 0.0
    %1812 = vmatprep.subr.mxu0 0.0
    %1813 = vmatpush1.msra.mxu0 0.0
    %1814 = vmatprep.subr.mxu0 0.0
    %1815 = vmatpush1.msra.mxu0 0.0
    %1816 = vmatprep.subr.mxu0 0.0
    %1817 = vmatpush1.msra.mxu0 0.0
    %1818 = vmatprep.subr.mxu0 0.0
    %1819 = vmatpush1.msra.mxu0 0.0
    %1820 = vmatprep.subr.mxu0 0.0
    %1821 = vmatpush1.msra.mxu0 0.0
    %1822 = vmatprep.subr.mxu0 0.0
    %1823 = vmatpush1.msra.mxu0 0.0
    %1824 = vmatprep.subr.mxu0 0.0
    %1825 = vmatpush1.msra.mxu0 0.0
    %1826 = vmatprep.subr.mxu0 0.0
    %1827 = vmatpush1.msra.mxu0 0.0
    %1828 = vmatprep.subr.mxu0 0.0
    %1829 = vmatpush1.msra.mxu0 0.0
    %1830 = vmatprep.subr.mxu0 0.0
    %1831 = vmatpush1.msra.mxu0 0.0
    %1832 = vmatprep.subr.mxu0 0.0
    %1833 = vmatpush1.msra.mxu0 0.0
    %1834 = vmatprep.subr.mxu0 0.0
    %1835 = vmatpush1.msra.mxu0 0.0
    %1836 = vmatprep.subr.mxu0 0.0
    %1837 = vmatpush1.msra.mxu0 0.0
    %1838 = vmatprep.subr.mxu0 0.0
    %1839 = vmatpush1.msra.mxu0 0.0
    %1840 = vmatprep.subr.mxu0 0.0
    %1841 = vmatpush1.msra.mxu0 0.0
    %1842 = vmatprep.mubr.f32.mxu0 0.0
    %1843 = vmatmul.mubr.f32.gmra.mrb[0].mxu0 %v1776
    %v1844 = vpop.f32.mrb[0].mxu0
    %v1845 = vadd.f32 %v80, %v1844
    %v1846 = vpop.f32.mrb[0].mxu0
    %1847 = vdwg.mxu0
    %1848 = vmatprep.subr.mxu0 0.0
    %1849 = vmatpush1.msra.mxu0 %v58
    %1850 = vmatprep.subr.mxu0 0.0
    %1851 = vmatpush1.msra.mxu0 %v59
    %1852 = vmatprep.subr.mxu0 0.0
    %1853 = vmatpush1.msra.mxu0 %v60
    %1854 = vmatprep.subr.mxu0 0.0
    %1855 = vmatpush1.msra.mxu0 %v61
    %1856 = vmatprep.subr.mxu0 0.0
    %1857 = vmatpush1.msra.mxu0 0.0
    %1858 = vmatprep.subr.mxu0 0.0
    %1859 = vmatpush1.msra.mxu0 0.0
    %1860 = vmatprep.subr.mxu0 0.0
    %1861 = vmatpush1.msra.mxu0 0.0
    %1862 = vmatprep.subr.mxu0 0.0
    %1863 = vmatpush1.msra.mxu0 0.0
    %1864 = vmatprep.subr.mxu0 0.0
    %1865 = vmatpush1.msra.mxu0 0.0
    %1866 = vmatprep.subr.mxu0 0.0
    %1867 = vmatpush1.msra.mxu0 0.0
    %1868 = vmatprep.subr.mxu0 0.0
    %1869 = vmatpush1.msra.mxu0 0.0
    %1870 = vmatprep.subr.mxu0 0.0
    %1871 = vmatpush1.msra.mxu0 0.0
    %1872 = vmatprep.subr.mxu0 0.0
    %1873 = vmatpush1.msra.mxu0 0.0
    %1874 = vmatprep.subr.mxu0 0.0
    %1875 = vmatpush1.msra.mxu0 0.0
    %1876 = vmatprep.subr.mxu0 0.0
    %1877 = vmatpush1.msra.mxu0 0.0
    %1878 = vmatprep.subr.mxu0 0.0
    %1879 = vmatpush1.msra.mxu0 0.0
    %1880 = vmatprep.subr.mxu0 0.0
    %1881 = vmatpush1.msra.mxu0 0.0
    %1882 = vmatprep.subr.mxu0 0.0
    %1883 = vmatpush1.msra.mxu0 0.0
    %1884 = vmatprep.subr.mxu0 0.0
    %1885 = vmatpush1.msra.mxu0 0.0
    %1886 = vmatprep.subr.mxu0 0.0
    %1887 = vmatpush1.msra.mxu0 0.0
    %1888 = vmatprep.subr.mxu0 0.0
    %1889 = vmatpush1.msra.mxu0 0.0
    %1890 = vmatprep.subr.mxu0 0.0
    %1891 = vmatpush1.msra.mxu0 0.0
    %1892 = vmatprep.subr.mxu0 0.0
    %1893 = vmatpush1.msra.mxu0 0.0
    %1894 = vmatprep.subr.mxu0 0.0
    %1895 = vmatpush1.msra.mxu0 0.0
    %1896 = vmatprep.subr.mxu0 0.0
    %1897 = vmatpush1.msra.mxu0 0.0
    %1898 = vmatprep.subr.mxu0 0.0
    %1899 = vmatpush1.msra.mxu0 0.0
    %1900 = vmatprep.subr.mxu0 0.0
    %1901 = vmatpush1.msra.mxu0 0.0
    %1902 = vmatprep.subr.mxu0 0.0
    %1903 = vmatpush1.msra.mxu0 0.0
    %1904 = vmatprep.subr.mxu0 0.0
    %1905 = vmatpush1.msra.mxu0 0.0
    %1906 = vmatprep.subr.mxu0 0.0
    %1907 = vmatpush1.msra.mxu0 0.0
    %1908 = vmatprep.subr.mxu0 0.0
    %1909 = vmatpush1.msra.mxu0 0.0
    %1910 = vmatprep.subr.mxu0 0.0
    %1911 = vmatpush1.msra.mxu0 0.0
    %1912 = vmatprep.mubr.f32.mxu0 0.0
    %1913 = vmatmul.mubr.f32.gmra.mrb[0].mxu0 %v1776
    %v1914 = vpop.f32.mrb[0].mxu0
    %v1915 = vadd.f32 %v160, %v1914
    %v1916 = vpop.f32.mrb[0].mxu0
    %1917 = vdwg.mxu0
    %1918 = vmatprep.subr.mxu0 0.0
    %1919 = vmatpush1.msra.mxu0 %v63
    %1920 = vmatprep.subr.mxu0 0.0
    %1921 = vmatpush1.msra.mxu0 %v64
    %1922 = vmatprep.subr.mxu0 0.0
    %1923 = vmatpush1.msra.mxu0 %v65
    %1924 = vmatprep.subr.mxu0 0.0
    %1925 = vmatpush1.msra.mxu0 %v66
    %1926 = vmatprep.subr.mxu0 0.0
    %1927 = vmatpush1.msra.mxu0 0.0
    %1928 = vmatprep.subr.mxu0 0.0
    %1929 = vmatpush1.msra.mxu0 0.0
    %1930 = vmatprep.subr.mxu0 0.0
    %1931 = vmatpush1.msra.mxu0 0.0
    %1932 = vmatprep.subr.mxu0 0.0
    %1933 = vmatpush1.msra.mxu0 0.0
    %1934 = vmatprep.subr.mxu0 0.0
    %1935 = vmatpush1.msra.mxu0 0.0
    %1936 = vmatprep.subr.mxu0 0.0
    %1937 = vmatpush1.msra.mxu0 0.0
    %1938 = vmatprep.subr.mxu0 0.0
    %1939 = vmatpush1.msra.mxu0 0.0
    %1940 = vmatprep.subr.mxu0 0.0
    %1941 = vmatpush1.msra.mxu0 0.0
    %1942 = vmatprep.subr.mxu0 0.0
    %1943 = vmatpush1.msra.mxu0 0.0
    %1944 = vmatprep.subr.mxu0 0.0
    %1945 = vmatpush1.msra.mxu0 0.0
    %1946 = vmatprep.subr.mxu0 0.0
    %1947 = vmatpush1.msra.mxu0 0.0
    %1948 = vmatprep.subr.mxu0 0.0
    %1949 = vmatpush1.msra.mxu0 0.0
    %1950 = vmatprep.subr.mxu0 0.0
    %1951 = vmatpush1.msra.mxu0 0.0
    %1952 = vmatprep.subr.mxu0 0.0
    %1953 = vmatpush1.msra.mxu0 0.0
    %1954 = vmatprep.subr.mxu0 0.0
    %1955 = vmatpush1.msra.mxu0 0.0
    %1956 = vmatprep.subr.mxu0 0.0
    %1957 = vmatpush1.msra.mxu0 0.0
    %1958 = vmatprep.subr.mxu0 0.0
    %1959 = vmatpush1.msra.mxu0 0.0
    %1960 = vmatprep.subr.mxu0 0.0
    %1961 = vmatpush1.msra.mxu0 0.0
    %1962 = vmatprep.subr.mxu0 0.0
    %1963 = vmatpush1.msra.mxu0 0.0
    %1964 = vmatprep.subr.mxu0 0.0
    %1965 = vmatpush1.msra.mxu0 0.0
    %1966 = vmatprep.subr.mxu0 0.0
    %1967 = vmatpush1.msra.mxu0 0.0
    %1968 = vmatprep.subr.mxu0 0.0
    %1969 = vmatpush1.msra.mxu0 0.0
    %1970 = vmatprep.subr.mxu0 0.0
    %1971 = vmatpush1.msra.mxu0 0.0
    %1972 = vmatprep.subr.mxu0 0.0
    %1973 = vmatpush1.msra.mxu0 0.0
    %1974 = vmatprep.subr.mxu0 0.0
    %1975 = vmatpush1.msra.mxu0 0.0
    %1976 = vmatprep.subr.mxu0 0.0
    %1977 = vmatpush1.msra.mxu0 0.0
    %1978 = vmatprep.subr.mxu0 0.0
    %1979 = vmatpush1.msra.mxu0 0.0
    %1980 = vmatprep.subr.mxu0 0.0
    %1981 = vmatpush1.msra.mxu0 0.0
    %1982 = vmatprep.mubr.f32.mxu0 0.0
    %1983 = vmatmul.mubr.f32.gmra.mrb[0].mxu0 %v1776
    %v1984 = vpop.f32.mrb[0].mxu0
    %v1985 = vadd.f32 %v236, %v1984
    %v1986 = vpop.f32.mrb[0].mxu0
    %1987 = vdwg.mxu0
    %v1988 = vadd.f32 %v1772, %v1845
    %v1989 = vxor.u32 %v1988, 2147483648
    %v1990 = vmul.f32 %v1989, 1.442695
    %v1991 = vpow.pop %v1990
    %v1992 = vadd.f32 %v1991, 1.0
    %v1993 = vrcp.pop %v1992
    %v1994 = vmul.f32 1.0, %v1993
    %v1995 = vadd.f32 %v1773, %v1915
    %v1996 = vxor.u32 %v1995, 2147483648
    %v1997 = vmul.f32 %v1996, 1.442695
    %v1998 = vpow.pop %v1997
    %v1999 = vadd.f32 %v1998, 1.0
    %v2000 = vrcp.pop %v1999
    %v2001 = vmul.f32 1.0, %v2000
    %v2002 = vmul.f32 %v1994, %v1985
    %v2003 = vadd.f32 %v1774, %v2002
    %v2004 = vtanh.pop %v2003
    %v2005 = vsub.f32 1.0, %v2001
    %v2006 = vmul.f32 %v2005, %v2004
    %v2007 = vmul.f32 %v2001, %v1768
    %v2008 = vadd.f32 %v2006, %v2007
    %s2009 = scalar_lea.vmem [#allocation8], 14
    %2010 = vst.msk [vmem:[%s2009] sm:$0x3] %vm329, %v2008
    %2011 = vst.msk [vmem:[#allocation2] sm:$0x3] %vm329, %v2008
    // Predicated region
    $region30: #{tpu_custom_call.1} parent=1 // pred_check
      _
    $region31: #{tpu_custom_call.1} parent=1 // pred_check_branch
      %2013 = sbr.rel (0) target = $region33
    $region32: #{tpu_custom_call.1} parent=1 // pred_region
      %s2015 = ssub.s32 256, 256
      %2016 = vsyncadd [#allocation5], %s2015
      %s2017 = sshll.u32 [#allocation8], 4
      %s2018 = int_to_ptr.vmem [resolvable:$true] %s2017
      %2023 = dma.vmem_to_hbm [thread:$0]  %s2018, 256, %s4, [#allocation5], 32, 32, 2
    $region33: #{tpu_custom_call.1} parent=1 // pred_fallthru
      _
    // Predicated region
    $region34: #{tpu_custom_call.1} parent=1 // pred_check
      _
    $region35: #{tpu_custom_call.1} parent=1 // pred_check_branch
      %2025 = sbr.rel (0) target = $region37
    $region36: #{tpu_custom_call.1} parent=1 // pred_region
      %2026 = dma.done [#allocation5], 256
    $region37: #{tpu_custom_call.1} parent=1 // pred_fallthru
      _
    %2027 = vsyncpa [#allocation4], 1
    %2028 = vsyncpa [#allocation7], 1
    %2029 = vsyncpa [#allocation5], 1

</llo_original>
